<compile_context>
chip_gen: v5e
topology: v5e:2x2
jax: 0.10.0
libtpu: 0.0.40
codegen_flags: <defaults>
</compile_context>

<pallas_src>
import jax
import jax.numpy as jnp
from jax.experimental import pallas as pl
from jax.experimental.pallas import tpu as pltpu

EMB_DIM = 4      # MsgBiasedMPNNFlockingLayer emb_dim (model default emb_dim=4)
LAYER_OUT = 4    # MsgBiasedMPNNFlockingLayer out_dim (== model layer_out)
OUT_DIM = 2      # model out_dim
NN_LAYERS = 4
NSTAGE = NN_LAYERS          # number of mlp_msg Linear layers == edge-streaming stages
BN_EPS = 1e-5

N_WEIGHTS = 9    # linear layers: 4 (mlp_msg) + 4 (mlp_upd) + 1 (lin_pred)
N_VECTORS = 23   # 9 biases + 7 BatchNorm gamma/beta pairs
W_COLS = 8       # max linear fan-in (mlp_upd first layer: layer_out + 4)


def _make_kernel(n, e_real, te):
    """Kernel factory: closes over static node count, real edge count, edge tile."""
    inv_e = 1.0 / float(e_real)

    def kernel(src_ref, dstr_ref, dstc_ref, hT_ref, invdeg_ref, w_ref, v_ref,
               out_ref, scr_ref, stats_ref, nacc_ref):
        s = pl.program_id(0)            # stage
        e = pl.program_id(1)            # edge tile
        n_e = pl.num_programs(1)

        W = w_ref[...]                  # (72, 8) packed Linear weights (torch (out,in))
        V = v_ref[...]                  # (4, 23) packed bias / BN-gamma / BN-beta cols

        def Wk(k, of, nf):              # weight slab k -> (out_f, in_f)
            return W[8 * k:8 * k + of, :nf]

        def Vc(c, f):                   # vector slab column c -> (f, 1), broadcasts on lanes
            return V[:f, c:c + 1]

        def valid_mask():               # 1.0 for real edges, 0.0 for padded lanes
            lane = jax.lax.broadcasted_iota(jnp.int32, (1, te), 1)
            return ((lane + e * te) < e_real).astype(jnp.float32)

        def acc_stats(col, x):          # running sum / sum-of-squares over real edges
            xm = x * valid_mask()
            stats_ref[:, col:col + 1] = (stats_ref[:, col:col + 1]
                                         + jnp.sum(xm, axis=1, keepdims=True))
            stats_ref[:, col + 1:col + 2] = (stats_ref[:, col + 1:col + 2]
                                             + jnp.sum(xm * x, axis=1, keepdims=True))

        def bn_tanh_stats(col, x, g, b):    # BN from finalized running sums + Tanh
            mean = stats_ref[:, col:col + 1] * inv_e
            var = stats_ref[:, col + 1:col + 2] * inv_e - mean * mean
            return jnp.tanh((x - mean) * jax.lax.rsqrt(var + BN_EPS) * g + b)

        # ---------------- global init (very first grid step) ----------------
        @pl.when((s == 0) & (e == 0))
        def _init():
            stats_ref[...] = jnp.zeros_like(stats_ref)
            nacc_ref[...] = jnp.zeros_like(nacc_ref)

        # ------- stage 0: on-chip gather (iota one-hot diff) + Linear 0 -------
        @pl.when(s == 0)
        def _stage0():
            dr = dstr_ref[...]                                        # (1, te) int32
            sr = src_ref[...]
            node = jax.lax.broadcasted_iota(jnp.int32, (n, te), 0)
            diffT = ((node == dr).astype(jnp.float32)
                     - (node == sr).astype(jnp.float32))              # (n, te)
            h_dif = jnp.dot(hT_ref[...], diffT,
                            preferred_element_type=jnp.float32)       # (4, te)
            keep = jnp.where(jnp.all(h_dif == 0.0, axis=0, keepdims=True),
                             0.0, 1.0)                                # (1, te)
            x = jnp.dot(Wk(0, EMB_DIM, 4), h_dif,
                        preferred_element_type=jnp.float32) + Vc(0, EMB_DIM)
            # rows 0..3: activation, row 4: keep-mask, rows 5..7: unused (full vreg slab)
            scr_ref[e] = jnp.concatenate(
                [x, keep, jnp.zeros((3, te), jnp.float32)], axis=0)
            acc_stats(0, x)

        # ------- stages 1..NSTAGE-2: BN + Tanh + Linear (streamed) -------
        for si in range(1, NSTAGE - 1):
            @pl.when(s == si)
            def _mid(si=si):
                data = scr_ref[e]                                     # (8, te)
                y = bn_tanh_stats(2 * (si - 1), data[:EMB_DIM],
                                  Vc(3 * si - 2, EMB_DIM), Vc(3 * si - 1, EMB_DIM))
                x = jnp.dot(Wk(si, EMB_DIM, EMB_DIM), y,
                            preferred_element_type=jnp.float32) + Vc(3 * si, EMB_DIM)
                scr_ref[e] = jnp.concatenate([x, data[EMB_DIM:]], axis=0)
                acc_stats(2 * si, x)

        # ------- last stage: BN + Tanh + Linear -> msg, masked matmul scatter -------
        sl = NSTAGE - 1

        @pl.when(s == sl)
        def _scatter():
            data = scr_ref[e]
            y = bn_tanh_stats(2 * (sl - 1), data[:EMB_DIM],
                              Vc(3 * sl - 2, EMB_DIM), Vc(3 * sl - 1, EMB_DIM))
            msg = jnp.dot(Wk(sl, LAYER_OUT, EMB_DIM), y,
                          preferred_element_type=jnp.float32) + Vc(3 * sl, LAYER_OUT)
            msg = msg * data[EMB_DIM:EMB_DIM + 1]   # zero msgs where h_i == h_j (covers pad lanes)
            dc = dstc_ref[...]                                        # (te, 1) int32
            lane_node = jax.lax.broadcasted_iota(jnp.int32, (te, n), 1)
            dst_oh = (lane_node == dc).astype(jnp.float32)            # (te, n)
            nacc_ref[...] = nacc_ref[...] + jnp.dot(
                msg, dst_oh, preferred_element_type=jnp.float32)      # (4, n)

        # ------- finalize: aggr add/mean split, mlp_upd (full-N BN), lin_pred -------
        @pl.when((s == sl) & (e == n_e - 1))
        def _finalize():
            hT = hT_ref[...]                                          # (4, n)
            summed = nacc_ref[...]                                    # (4, n)
            rows = jax.lax.broadcasted_iota(jnp.int32, (LAYER_OUT, n), 0)
            aggr = summed * jnp.where(rows >= LAYER_OUT // 2, invdeg_ref[...], 1.0)

            def bn_tanh(x, g, b):   # exact full-batch node BN (N is untiled)
                mu = jnp.mean(x, axis=1, keepdims=True)
                var = jnp.mean(x * x, axis=1, keepdims=True) - mu * mu
                return jnp.tanh((x - mu) * jax.lax.rsqrt(var + BN_EPS) * g + b)

            k = NSTAGE                      # next weight slab index
            c = 3 * NSTAGE - 2              # next vector slab column
            # split first mlp_upd Linear: cat([h, aggr]) @ W^T == W_h h + W_a aggr
            w0 = Wk(k, EMB_DIM, LAYER_OUT + 4); k += 1
            x = (jnp.dot(w0[:, :4], hT, preferred_element_type=jnp.float32)
                 + jnp.dot(w0[:, 4:], aggr, preferred_element_type=jnp.float32)
                 + Vc(c, EMB_DIM)); c += 1
            for _ in range(NN_LAYERS - 2):
                x = bn_tanh(x, Vc(c, EMB_DIM), Vc(c + 1, EMB_DIM)); c += 2
                x = jnp.dot(Wk(k, EMB_DIM, EMB_DIM), x,
                            preferred_element_type=jnp.float32) + Vc(c, EMB_DIM)
                k += 1; c += 1
            x = bn_tanh(x, Vc(c, EMB_DIM), Vc(c + 1, EMB_DIM)); c += 2
            x = jnp.dot(Wk(k, LAYER_OUT, EMB_DIM), x,
                        preferred_element_type=jnp.float32) + Vc(c, LAYER_OUT)
            k += 1; c += 1
            x = bn_tanh(x, Vc(c, LAYER_OUT), Vc(c + 1, LAYER_OUT)); c += 2
            out_ref[...] = (jnp.dot(Wk(k, OUT_DIM, LAYER_OUT), x,
                                    preferred_element_type=jnp.float32)
                            + Vc(c, OUT_DIM))

    return kernel


def flocking_forward(h, src, dst, w_slab, v_slab, *, te=None):
    """h: (N, 4) f32 node features; src/dst: (E,) int edge endpoints (j -> i)."""
    n = int(h.shape[0])
    e_real = int(src.shape[0])

    # Edge tile size (lane axis): multiple of 128, sized so the per-tile on-chip
    # one-hot temporaries (~8 * N * tE f32 bytes) stay well under the VMEM budget.
    if te is None:
        te = 512
        while te > 128 and 8 * n * te * 4 > (16 << 20):
            te //= 2
    assert te % 128 == 0 and te > 0
    e_pad = ((e_real + te - 1) // te) * te
    num_e = e_pad // te
    pad = e_pad - e_real

    # Tiny preprocessed inputs only (no dense incidence!):
    hT = jnp.asarray(h, jnp.float32).T                                 # (4, n)
    src_i = jnp.asarray(src, jnp.int32)
    dst_i = jnp.asarray(dst, jnp.int32)
    src_row = jnp.pad(src_i, (0, pad)).reshape(1, e_pad)               # pad edges -> node 0
    dst_row = jnp.pad(dst_i, (0, pad)).reshape(1, e_pad)               # (self-loop => msg masked)
    dst_col = dst_row.reshape(e_pad, 1)
    deg = jnp.zeros((n,), jnp.float32).at[dst_i].add(1.0)
    inv_deg = (1.0 / jnp.maximum(deg, 1.0)).reshape(1, n)              # scatter-mean clamp

    kernel = _make_kernel(n, e_real, te)

    # Generation-aware scoped-VMEM budget (128 MiB on v5e/v6e, 64 MiB on v7x).
    try:
        cap = int(pltpu.get_tpu_info().vmem_capacity_bytes)
    except Exception:
        cap = 64 << 20
    scratch_bytes = (num_e * 8 * te + EMB_DIM * 8 + LAYER_OUT * n) * 4
    resident_bytes = ((4 + 1 + OUT_DIM) * n
                      + 8 * N_WEIGHTS * W_COLS + 4 * N_VECTORS) * 4
    tile_bytes = 2 * (3 * te) * 4                 # double-buffered src/dst index tiles
    temp_bytes = 8 * n * te * 4                   # in-kernel one-hot / diff temporaries
    need = scratch_bytes + resident_bytes + tile_bytes + temp_bytes
    vmem_limit = int(min(max(2 * need + (8 << 20), 32 << 20), cap - (16 << 20)))

    grid_spec = pltpu.PrefetchScalarGridSpec(
        num_scalar_prefetch=0,
        grid=(NSTAGE, num_e),
        in_specs=[
            pl.BlockSpec((1, te), lambda s, e: (0, e)),                # src (row-oriented)
            pl.BlockSpec((1, te), lambda s, e: (0, e)),                # dst (row-oriented)
            pl.BlockSpec((te, 1), lambda s, e: (e, 0)),                # dst (column-oriented)
            pl.BlockSpec((4, n), lambda s, e: (0, 0)),                 # hT
            pl.BlockSpec((1, n), lambda s, e: (0, 0)),                 # 1/max(deg,1)
            pl.BlockSpec((8 * N_WEIGHTS, W_COLS), lambda s, e: (0, 0)),
            pl.BlockSpec((4, N_VECTORS), lambda s, e: (0, 0)),
        ],
        out_specs=pl.BlockSpec((OUT_DIM, n), lambda s, e: (0, 0)),
        scratch_shapes=[
            pltpu.VMEM((num_e, 8, te), jnp.float32),          # edge activations + keep mask
            pltpu.VMEM((EMB_DIM, max(8, 2 * (NSTAGE - 1))), jnp.float32),  # BN sums / sumsq
            pltpu.VMEM((LAYER_OUT, n), jnp.float32),          # node scatter accumulator
        ],
    )
    out_T = pl.pallas_call(
        kernel,
        out_shape=jax.ShapeDtypeStruct((OUT_DIM, n), jnp.float32),
        grid_spec=grid_spec,
        compiler_params=pltpu.CompilerParams(
            dimension_semantics=("arbitrary", "arbitrary"),
            vmem_limit_bytes=vmem_limit),
    )(src_row, dst_row, dst_col, hT, inv_deg, w_slab, v_slab)
    return out_T.T                                                     # (N, 2)


def init_params(key):
    """Build packed parameter slabs (PyTorch default inits).

    w_slab: (8 * N_WEIGHTS, 8) f32 — Linear weight k (torch layout (out, in))
            lives at rows [8k : 8k+out_f], cols [:in_f].
    v_slab: (4, N_VECTORS) f32 — bias / BN-gamma / BN-beta k lives in column k,
            rows [:f].  Order matches the kernel's consumption order exactly.
    """
    keys = jax.random.split(key, 18)
    kit = iter(keys)
    weights, vectors = [], []

    def lin(in_f, out_f):
        bound = 1.0 / (in_f ** 0.5)
        w = jax.random.uniform(next(kit), (out_f, in_f), jnp.float32, -bound, bound)
        b = jax.random.uniform(next(kit), (out_f,), jnp.float32, -bound, bound)
        weights.append(w)
        vectors.append(b)

    def bn(c):  # PyTorch default init: gamma = 1, beta = 0
        vectors.append(jnp.ones((c,), jnp.float32))
        vectors.append(jnp.zeros((c,), jnp.float32))

    # mlp_msg
    lin(4, EMB_DIM)
    for _ in range(NN_LAYERS - 2):
        bn(EMB_DIM)
        lin(EMB_DIM, EMB_DIM)
    bn(EMB_DIM)
    lin(EMB_DIM, LAYER_OUT)
    # mlp_upd
    lin(LAYER_OUT + 4, EMB_DIM)
    for _ in range(NN_LAYERS - 2):
        bn(EMB_DIM)
        lin(EMB_DIM, EMB_DIM)
    bn(EMB_DIM)
    lin(EMB_DIM, LAYER_OUT)
    bn(LAYER_OUT)
    # lin_pred
    lin(LAYER_OUT, OUT_DIM)

    assert len(weights) == N_WEIGHTS and len(vectors) == N_VECTORS

    w_slab = jnp.zeros((8 * N_WEIGHTS, W_COLS), jnp.float32)
    for k, w in enumerate(weights):
        w_slab = w_slab.at[8 * k:8 * k + w.shape[0], :w.shape[1]].set(w)
    v_slab = jnp.zeros((4, N_VECTORS), jnp.float32)
    for k, v in enumerate(vectors):
        v_slab = v_slab.at[:v.shape[0], k].set(v)
    return w_slab, v_slab


def reference_forward(h, src, dst, w_slab, v_slab):
    """Pure-JAX node-major reference (mirrors the PyTorch module) for sanity checks."""
    wi = [0]; vi = [0]
    prec = jax.lax.Precision.HIGHEST

    def next_w(out_f, in_f):
        k = wi[0]; wi[0] += 1
        return w_slab[8 * k:8 * k + out_f, :in_f]      # torch Linear.weight layout

    def next_v(f):
        k = vi[0]; vi[0] += 1
        return v_slab[:f, k]

    def linear(x, out_f, in_f):
        w = next_w(out_f, in_f)
        b = next_v(out_f)
        return jnp.dot(x, w.T, precision=prec) + b

    def bn_tanh(x, f):
        g = next_v(f)
        b = next_v(f)
        mu = jnp.mean(x, axis=0)
        var = jnp.mean((x - mu) ** 2, axis=0)
        return jnp.tanh((x - mu) * jax.lax.rsqrt(var + BN_EPS) * g + b)

    h_dif = h[dst] - h[src]                            # h_i - h_j (i = target, j = source)
    x = linear(h_dif, EMB_DIM, 4)
    for _ in range(NN_LAYERS - 2):
        x = bn_tanh(x, EMB_DIM)
        x = linear(x, EMB_DIM, EMB_DIM)
    x = bn_tanh(x, EMB_DIM)
    msg = linear(x, LAYER_OUT, EMB_DIM)
    msg = jnp.where(jnp.all(h_dif == 0.0, axis=1, keepdims=True), 0.0, msg)

    n = h.shape[0]
    summed = jnp.zeros((n, LAYER_OUT), jnp.float32).at[dst].add(msg)
    counts = jnp.maximum(jnp.zeros((n,), jnp.float32).at[dst].add(1.0), 1.0)[:, None]
    half = LAYER_OUT // 2
    aggr = jnp.concatenate([summed[:, :half], summed[:, half:] / counts], axis=1)

    x = jnp.concatenate([h, aggr], axis=1)
    x = linear(x, EMB_DIM, LAYER_OUT + 4)
    for _ in range(NN_LAYERS - 2):
        x = bn_tanh(x, EMB_DIM)
        x = linear(x, EMB_DIM, EMB_DIM)
    x = bn_tanh(x, EMB_DIM)
    x = linear(x, LAYER_OUT, EMB_DIM)
    x = bn_tanh(x, LAYER_OUT)
    return linear(x, OUT_DIM, LAYER_OUT)


if __name__ == "__main__":
    key = jax.random.PRNGKey(0)
    k_pos, k_vel, k_param = jax.random.split(key, 3)

    N = 64
    pos = jax.random.normal(k_pos, (N, 2), jnp.float32)
    vel = jax.random.normal(k_vel, (N, 2), jnp.float32)
    h = jnp.concatenate([pos, vel], axis=-1)           # (N, 4) == cat(pos, vel)

    # Directed ring graph: every node receives from neighbours at offsets
    # +-1, +-2, plus one self-loop to exercise the (h_i - h_j == 0) zeroing.
    idx = jnp.arange(N, dtype=jnp.int32)
    src = jnp.concatenate([(idx + o) % N for o in (1, -1, 2, -2)]
                          + [jnp.array([0], jnp.int32)])               # (257,)
    dst = jnp.concatenate([idx for _ in (1, -1, 2, -2)]
                          + [jnp.array([0], jnp.int32)])               # (257,)

    w_slab, v_slab = init_params(k_param)
    ref = reference_forward(h, src, dst, w_slab, v_slab)

    # te=128 exercises the multi-tile streaming path (3 edge tiles, padded E);
    # te=None picks the default single-tile path for this small graph.
    for te in (128, None):
        out = flocking_forward(h, src, dst, w_slab, v_slab, te=te)
        jax.block_until_ready(out)
        assert out.shape == (N, OUT_DIM) and out.dtype == jnp.float32
        max_err = float(jnp.max(jnp.abs(out - ref)))
        assert bool(jnp.allclose(out, ref, rtol=5e-3, atol=5e-3)), (te, max_err)
    print("KERNEL_OK")
</pallas_src>

<mosaic_0001>
module attributes {stable_mosaic.version = 11 : i64} {
  func.func @kernel(%arg0: i32, %arg1: i32, %arg2: memref<1x128xi32, #tpu.memory_space<vmem>>, %arg3: memref<1x128xi32, #tpu.memory_space<vmem>>, %arg4: memref<128x1xi32, #tpu.memory_space<vmem>>, %arg5: memref<4x64xf32, #tpu.memory_space<vmem>>, %arg6: memref<1x64xf32, #tpu.memory_space<vmem>>, %arg7: memref<72x8xf32, #tpu.memory_space<vmem>>, %arg8: memref<4x23xf32, #tpu.memory_space<vmem>>, %arg9: memref<2x64xf32, #tpu.memory_space<vmem>>, %arg10: memref<3x8x128xf32, #tpu.memory_space<vmem>>, %arg11: memref<4x8xf32, #tpu.memory_space<vmem>>, %arg12: memref<4x64xf32, #tpu.memory_space<vmem>>) attributes {dimension_semantics = [#tpu.dimension_semantics<arbitrary>, #tpu.dimension_semantics<arbitrary>], iteration_bounds = array<i64: 4, 3>, scalar_prefetch = 0 : i64, scratch_operands = 3 : i64, tpu.core_type = #tpu.core_type<tc>, window_params = [{transform_indices = @transform_0, window_bounds = array<i64: 1, 128>}, {transform_indices = @transform_1, window_bounds = array<i64: 1, 128>}, {transform_indices = @transform_2, window_bounds = array<i64: 128, 1>}, {pipeline_mode = #tpu.pipeline_mode<synchronous>, transform_indices = @transform_3, window_bounds = array<i64: 4, 64>}, {pipeline_mode = #tpu.pipeline_mode<synchronous>, transform_indices = @transform_4, window_bounds = array<i64: 1, 64>}, {pipeline_mode = #tpu.pipeline_mode<synchronous>, transform_indices = @transform_5, window_bounds = array<i64: 72, 8>}, {pipeline_mode = #tpu.pipeline_mode<synchronous>, transform_indices = @transform_6, window_bounds = array<i64: 4, 23>}, {pipeline_mode = #tpu.pipeline_mode<synchronous>, transform_indices = @transform_7, window_bounds = array<i64: 2, 64>}]} {
    %c0 = arith.constant 0 : index
    %c0_0 = arith.constant 0 : index
    %0 = vector.load %arg7[%c0, %c0_0] : memref<72x8xf32, #tpu.memory_space<vmem>>, vector<72x8xf32>
    %c0_1 = arith.constant 0 : index
    %c0_2 = arith.constant 0 : index
    %1 = vector.load %arg8[%c0_1, %c0_2] : memref<4x23xf32, #tpu.memory_space<vmem>>, vector<4x23xf32>
    %c0_i32 = arith.constant 0 : i32
    %2 = arith.cmpi eq, %arg0, %c0_i32 : i32
    %c0_i32_3 = arith.constant 0 : i32
    %3 = arith.cmpi eq, %arg1, %c0_i32_3 : i32
    %4 = arith.andi %2, %3 : i1
    %5 = arith.extui %4 : i1 to i32
    %c0_i32_4 = arith.constant 0 : i32
    %6 = arith.cmpi ne, %5, %c0_i32_4 : i32
    scf.if %6 {
      %cst = arith.constant 0.000000e+00 : f32
      %24 = vector.broadcast %cst : f32 to vector<4x8xf32>
      %c0_13 = arith.constant 0 : index
      %c0_14 = arith.constant 0 : index
      %25 = vector.load %arg11[%c0_13, %c0_14] : memref<4x8xf32, #tpu.memory_space<vmem>>, vector<4x8xf32>
      tpu.vector_store %arg11[%c0_13, %c0_14], %24 {strides = array<i32>} : memref<4x8xf32, #tpu.memory_space<vmem>>, vector<4x8xf32>,
      %cst_15 = arith.constant 0.000000e+00 : f32
      %26 = vector.broadcast %cst_15 : f32 to vector<4x64xf32>
      %c0_16 = arith.constant 0 : index
      %c0_17 = arith.constant 0 : index
      %27 = vector.load %arg12[%c0_16, %c0_17] : memref<4x64xf32, #tpu.memory_space<vmem>>, vector<4x64xf32>
      tpu.vector_store %arg12[%c0_16, %c0_17], %26 {strides = array<i32>} : memref<4x64xf32, #tpu.memory_space<vmem>>, vector<4x64xf32>,
    } else {
    }
    %c0_i32_5 = arith.constant 0 : i32
    %7 = arith.cmpi eq, %arg0, %c0_i32_5 : i32
    %8 = arith.extui %7 : i1 to i32
    %c0_i32_6 = arith.constant 0 : i32
    %9 = arith.cmpi ne, %8, %c0_i32_6 : i32
    scf.if %9 {
      %c0_13 = arith.constant 0 : index
      %c0_14 = arith.constant 0 : index
      %24 = vector.load %arg3[%c0_13, %c0_14] : memref<1x128xi32, #tpu.memory_space<vmem>>, vector<1x128xi32>
      %c0_15 = arith.constant 0 : index
      %c0_16 = arith.constant 0 : index
      %25 = vector.load %arg2[%c0_15, %c0_16] : memref<1x128xi32, #tpu.memory_space<vmem>>, vector<1x128xi32>
      %26 = tpu.iota {dimensions = array<i32: 0>} : vector<64x128xi32>
      %27 = vector.broadcast %24 : vector<1x128xi32> to vector<64x128xi32>
      %28 = arith.cmpi eq, %26, %27 : vector<64x128xi32>
      %29 = arith.extui %28 : vector<64x128xi1> to vector<64x128xi32>
      %30 = arith.sitofp %29 : vector<64x128xi32> to vector<64x128xf32>
      %31 = vector.broadcast %25 : vector<1x128xi32> to vector<64x128xi32>
      %32 = arith.cmpi eq, %26, %31 : vector<64x128xi32>
      %33 = arith.extui %32 : vector<64x128xi1> to vector<64x128xi32>
      %34 = arith.sitofp %33 : vector<64x128xi32> to vector<64x128xf32>
      %35 = arith.subf %30, %34 : vector<64x128xf32>
      %c0_17 = arith.constant 0 : index
      %c0_18 = arith.constant 0 : index
      %36 = vector.load %arg5[%c0_17, %c0_18] : memref<4x64xf32, #tpu.memory_space<vmem>>, vector<4x64xf32>
      %cst = arith.constant dense<0.000000e+00> : vector<4x128xf32>
      %37 = tpu.matmul %36, %35, %cst {dimension_numbers = #tpu.dot_dimension_numbers<[1], [0], [0], [1], [0, 0, 1, 1], [], []>} : vector<4x64xf32>, vector<64x128xf32>, vector<4x128xf32> -> vector<4x128xf32>
      %cst_19 = arith.constant 0.000000e+00 : f32
      %38 = vector.broadcast %cst_19 : f32 to vector<4x128xf32>
      %39 = arith.cmpf oeq, %37, %38 : vector<4x128xf32>
      %cst_20 = arith.constant 1.000000e+00 : f32
      %cst_21 = arith.constant 0.000000e+00 : f32
      %40 = vector.broadcast %cst_20 : f32 to vector<4x128xf32>
      %41 = vector.broadcast %cst_21 : f32 to vector<4x128xf32>
      %42 = arith.select %39, %40, %41 : vector<4x128xi1>, vector<4x128xf32>
      %cst_22 = arith.constant dense<0x7F800000> : vector<128xf32>
      %43 = vector.multi_reduction <minimumf>, %42, %cst_22 [0] : vector<4x128xf32> to vector<128xf32>
      %cst_23 = arith.constant 0.000000e+00 : f32
      %44 = vector.broadcast %cst_23 : f32 to vector<128xf32>
      %45 = arith.cmpf ogt, %43, %44 : vector<128xf32>
      %46 = vector.shape_cast %45 : vector<128xi1> to vector<1x128xi1>
      %cst_24 = arith.constant 0.000000e+00 : f32
      %cst_25 = arith.constant 1.000000e+00 : f32
      %47 = vector.broadcast %cst_24 : f32 to vector<1x128xf32>
      %48 = vector.broadcast %cst_25 : f32 to vector<1x128xf32>
      %49 = arith.select %46, %47, %48 : vector<1x128xi1>, vector<1x128xf32>
      %50 = vector.extract_strided_slice %0 {offsets = [0, 0], sizes = [4, 4], strides = [1, 1]} : vector<72x8xf32> to vector<4x4xf32>
      %cst_26 = arith.constant dense<0.000000e+00> : vector<4x128xf32>
      %51 = tpu.matmul %50, %37, %cst_26 {dimension_numbers = #tpu.dot_dimension_numbers<[1], [0], [0], [1], [0, 0, 1, 1], [], []>} : vector<4x4xf32>, vector<4x128xf32>, vector<4x128xf32> -> vector<4x128xf32>
      %52 = vector.extract_strided_slice %1 {offsets = [0, 0], sizes = [4, 1], strides = [1, 1]} : vector<4x23xf32> to vector<4x1xf32>
      %53 = vector.broadcast %52 : vector<4x1xf32> to vector<4x128xf32>
      %54 = arith.addf %51, %53 : vector<4x128xf32>
      %cst_27 = arith.constant 0.000000e+00 : f32
      %55 = vector.broadcast %cst_27 : f32 to vector<3x128xf32>
      %56 = tpu.concatenate %54, %49, %55 in 0 : vector<4x128xf32>, vector<1x128xf32>, vector<3x128xf32> -> vector<8x128xf32>
      %57 = arith.index_cast %arg1 : i32 to index
      %c0_28 = arith.constant 0 : index
      %c0_29 = arith.constant 0 : index
      %58 = vector.load %arg10[%57, %c0_28, %c0_29] : memref<3x8x128xf32, #tpu.memory_space<vmem>>, vector<1x8x128xf32>
      %59 = vector.shape_cast %58 : vector<1x8x128xf32> to vector<8x128xf32>
      %60 = vector.shape_cast %56 : vector<8x128xf32> to vector<1x8x128xf32>
      tpu.vector_store %arg10[%57, %c0_28, %c0_29], %60 {strides = array<i32>} : memref<3x8x128xf32, #tpu.memory_space<vmem>>, vector<1x8x128xf32>,
      %61 = tpu.iota {dimensions = array<i32: 1>} : vector<1x128xi32>
      %c128_i32 = arith.constant 128 : i32
      %62 = arith.muli %arg1, %c128_i32 : i32
      %63 = vector.broadcast %62 : i32 to vector<1x128xi32>
      %64 = arith.addi %61, %63 : vector<1x128xi32>
      %c257_i32 = arith.constant 257 : i32
      %65 = vector.broadcast %c257_i32 : i32 to vector<1x128xi32>
      %66 = arith.cmpi slt, %64, %65 : vector<1x128xi32>
      %67 = arith.extui %66 : vector<1x128xi1> to vector<1x128xi32>
      %68 = arith.sitofp %67 : vector<1x128xi32> to vector<1x128xf32>
      %69 = vector.broadcast %68 : vector<1x128xf32> to vector<4x128xf32>
      %70 = arith.mulf %54, %69 : vector<4x128xf32>
      %c0_30 = arith.constant 0 : index
      %c0_31 = arith.constant 0 : index
      %71 = vector.load %arg11[%c0_30, %c0_31] : memref<4x8xf32, #tpu.memory_space<vmem>>, vector<4x1xf32>
      %cst_32 = arith.constant dense<0.000000e+00> : vector<4xf32>
      %72 = vector.multi_reduction <add>, %70, %cst_32 [1] : vector<4x128xf32> to vector<4xf32>
      %73 = vector.shape_cast %72 : vector<4xf32> to vector<4x1xf32>
      %74 = arith.addf %71, %73 : vector<4x1xf32>
      %c0_33 = arith.constant 0 : index
      %c0_34 = arith.constant 0 : index
      %75 = vector.load %arg11[%c0_33, %c0_34] : memref<4x8xf32, #tpu.memory_space<vmem>>, vector<4x1xf32>
      tpu.vector_store %arg11[%c0_33, %c0_34], %74 {strides = array<i32>} : memref<4x8xf32, #tpu.memory_space<vmem>>, vector<4x1xf32>,
      %c0_35 = arith.constant 0 : index
      %c1 = arith.constant 1 : index
      %76 = vector.load %arg11[%c0_35, %c1] : memref<4x8xf32, #tpu.memory_space<vmem>>, vector<4x1xf32>
      %77 = arith.mulf %70, %54 : vector<4x128xf32>
      %cst_36 = arith.constant dense<0.000000e+00> : vector<4xf32>
      %78 = vector.multi_reduction <add>, %77, %cst_36 [1] : vector<4x128xf32> to vector<4xf32>
      %79 = vector.shape_cast %78 : vector<4xf32> to vector<4x1xf32>
      %80 = arith.addf %76, %79 : vector<4x1xf32>
      %c0_37 = arith.constant 0 : index
      %c1_38 = arith.constant 1 : index
      %81 = vector.load %arg11[%c0_37, %c1_38] : memref<4x8xf32, #tpu.memory_space<vmem>>, vector<4x1xf32>
      tpu.vector_store %arg11[%c0_37, %c1_38], %80 {strides = array<i32>} : memref<4x8xf32, #tpu.memory_space<vmem>>, vector<4x1xf32>,
    } else {
    }
    %c1_i32 = arith.constant 1 : i32
    %10 = arith.cmpi eq, %arg0, %c1_i32 : i32
    %11 = arith.extui %10 : i1 to i32
    %c0_i32_7 = arith.constant 0 : i32
    %12 = arith.cmpi ne, %11, %c0_i32_7 : i32
    scf.if %12 {
      %24 = arith.index_cast %arg1 : i32 to index
      %c0_13 = arith.constant 0 : index
      %c0_14 = arith.constant 0 : index
      %25 = vector.load %arg10[%24, %c0_13, %c0_14] : memref<3x8x128xf32, #tpu.memory_space<vmem>>, vector<1x8x128xf32>
      %26 = vector.shape_cast %25 : vector<1x8x128xf32> to vector<8x128xf32>
      %27 = vector.extract_strided_slice %26 {offsets = [0, 0], sizes = [4, 128], strides = [1, 1]} : vector<8x128xf32> to vector<4x128xf32>
      %28 = vector.extract_strided_slice %1 {offsets = [0, 1], sizes = [4, 1], strides = [1, 1]} : vector<4x23xf32> to vector<4x1xf32>
      %29 = vector.extract_strided_slice %1 {offsets = [0, 2], sizes = [4, 1], strides = [1, 1]} : vector<4x23xf32> to vector<4x1xf32>
      %c0_15 = arith.constant 0 : index
      %c0_16 = arith.constant 0 : index
      %30 = vector.load %arg11[%c0_15, %c0_16] : memref<4x8xf32, #tpu.memory_space<vmem>>, vector<4x1xf32>
      %cst = arith.constant 0.00389105058 : f32
      %31 = vector.broadcast %cst : f32 to vector<4x1xf32>
      %32 = arith.mulf %30, %31 : vector<4x1xf32>
      %c0_17 = arith.constant 0 : index
      %c1 = arith.constant 1 : index
      %33 = vector.load %arg11[%c0_17, %c1] : memref<4x8xf32, #tpu.memory_space<vmem>>, vector<4x1xf32>
      %cst_18 = arith.constant 0.00389105058 : f32
      %34 = vector.broadcast %cst_18 : f32 to vector<4x1xf32>
      %35 = arith.mulf %33, %34 : vector<4x1xf32>
      %36 = arith.mulf %32, %32 : vector<4x1xf32>
      %37 = arith.subf %35, %36 : vector<4x1xf32>
      %38 = vector.broadcast %32 : vector<4x1xf32> to vector<4x128xf32>
      %39 = arith.subf %27, %38 : vector<4x128xf32>
      %cst_19 = arith.constant 9.99999974E-6 : f32
      %40 = vector.broadcast %cst_19 : f32 to vector<4x1xf32>
      %41 = arith.addf %37, %40 : vector<4x1xf32>
      %42 = math.rsqrt %41 : vector<4x1xf32>
      %43 = vector.broadcast %42 : vector<4x1xf32> to vector<4x128xf32>
      %44 = arith.mulf %39, %43 : vector<4x128xf32>
      %45 = vector.broadcast %28 : vector<4x1xf32> to vector<4x128xf32>
      %46 = arith.mulf %44, %45 : vector<4x128xf32>
      %47 = vector.broadcast %29 : vector<4x1xf32> to vector<4x128xf32>
      %48 = arith.addf %46, %47 : vector<4x128xf32>
      %49 = math.tanh %48 : vector<4x128xf32>
      %50 = vector.extract_strided_slice %0 {offsets = [8, 0], sizes = [4, 4], strides = [1, 1]} : vector<72x8xf32> to vector<4x4xf32>
      %cst_20 = arith.constant dense<0.000000e+00> : vector<4x128xf32>
      %51 = tpu.matmul %50, %49, %cst_20 {dimension_numbers = #tpu.dot_dimension_numbers<[1], [0], [0], [1], [0, 0, 1, 1], [], []>} : vector<4x4xf32>, vector<4x128xf32>, vector<4x128xf32> -> vector<4x128xf32>
      %52 = vector.extract_strided_slice %1 {offsets = [0, 3], sizes = [4, 1], strides = [1, 1]} : vector<4x23xf32> to vector<4x1xf32>
      %53 = vector.broadcast %52 : vector<4x1xf32> to vector<4x128xf32>
      %54 = arith.addf %51, %53 : vector<4x128xf32>
      %55 = vector.extract_strided_slice %26 {offsets = [4, 0], sizes = [4, 128], strides = [1, 1]} : vector<8x128xf32> to vector<4x128xf32>
      %56 = tpu.concatenate %54, %55 in 0 : vector<4x128xf32>, vector<4x128xf32> -> vector<8x128xf32>
      %57 = arith.index_cast %arg1 : i32 to index
      %c0_21 = arith.constant 0 : index
      %c0_22 = arith.constant 0 : index
      %58 = vector.load %arg10[%57, %c0_21, %c0_22] : memref<3x8x128xf32, #tpu.memory_space<vmem>>, vector<1x8x128xf32>
      %59 = vector.shape_cast %58 : vector<1x8x128xf32> to vector<8x128xf32>
      %60 = vector.shape_cast %56 : vector<8x128xf32> to vector<1x8x128xf32>
      tpu.vector_store %arg10[%57, %c0_21, %c0_22], %60 {strides = array<i32>} : memref<3x8x128xf32, #tpu.memory_space<vmem>>, vector<1x8x128xf32>,
      %61 = tpu.iota {dimensions = array<i32: 1>} : vector<1x128xi32>
      %c128_i32 = arith.constant 128 : i32
      %62 = arith.muli %arg1, %c128_i32 : i32
      %63 = vector.broadcast %62 : i32 to vector<1x128xi32>
      %64 = arith.addi %61, %63 : vector<1x128xi32>
      %c257_i32 = arith.constant 257 : i32
      %65 = vector.broadcast %c257_i32 : i32 to vector<1x128xi32>
      %66 = arith.cmpi slt, %64, %65 : vector<1x128xi32>
      %67 = arith.extui %66 : vector<1x128xi1> to vector<1x128xi32>
      %68 = arith.sitofp %67 : vector<1x128xi32> to vector<1x128xf32>
      %69 = vector.broadcast %68 : vector<1x128xf32> to vector<4x128xf32>
      %70 = arith.mulf %54, %69 : vector<4x128xf32>
      %c0_23 = arith.constant 0 : index
      %c2 = arith.constant 2 : index
      %71 = vector.load %arg11[%c0_23, %c2] : memref<4x8xf32, #tpu.memory_space<vmem>>, vector<4x1xf32>
      %cst_24 = arith.constant dense<0.000000e+00> : vector<4xf32>
      %72 = vector.multi_reduction <add>, %70, %cst_24 [1] : vector<4x128xf32> to vector<4xf32>
      %73 = vector.shape_cast %72 : vector<4xf32> to vector<4x1xf32>
      %74 = arith.addf %71, %73 : vector<4x1xf32>
      %c0_25 = arith.constant 0 : index
      %c2_26 = arith.constant 2 : index
      %75 = vector.load %arg11[%c0_25, %c2_26] : memref<4x8xf32, #tpu.memory_space<vmem>>, vector<4x1xf32>
      tpu.vector_store %arg11[%c0_25, %c2_26], %74 {strides = array<i32>} : memref<4x8xf32, #tpu.memory_space<vmem>>, vector<4x1xf32>,
      %c0_27 = arith.constant 0 : index
      %c3 = arith.constant 3 : index
      %76 = vector.load %arg11[%c0_27, %c3] : memref<4x8xf32, #tpu.memory_space<vmem>>, vector<4x1xf32>
      %77 = arith.mulf %70, %54 : vector<4x128xf32>
      %cst_28 = arith.constant dense<0.000000e+00> : vector<4xf32>
      %78 = vector.multi_reduction <add>, %77, %cst_28 [1] : vector<4x128xf32> to vector<4xf32>
      %79 = vector.shape_cast %78 : vector<4xf32> to vector<4x1xf32>
      %80 = arith.addf %76, %79 : vector<4x1xf32>
      %c0_29 = arith.constant 0 : index
      %c3_30 = arith.constant 3 : index
      %81 = vector.load %arg11[%c0_29, %c3_30] : memref<4x8xf32, #tpu.memory_space<vmem>>, vector<4x1xf32>
      tpu.vector_store %arg11[%c0_29, %c3_30], %80 {strides = array<i32>} : memref<4x8xf32, #tpu.memory_space<vmem>>, vector<4x1xf32>,
    } else {
    }
    %c2_i32 = arith.constant 2 : i32
    %13 = arith.cmpi eq, %arg0, %c2_i32 : i32
    %14 = arith.extui %13 : i1 to i32
    %c0_i32_8 = arith.constant 0 : i32
    %15 = arith.cmpi ne, %14, %c0_i32_8 : i32
    scf.if %15 {
      %24 = arith.index_cast %arg1 : i32 to index
      %c0_13 = arith.constant 0 : index
      %c0_14 = arith.constant 0 : index
      %25 = vector.load %arg10[%24, %c0_13, %c0_14] : memref<3x8x128xf32, #tpu.memory_space<vmem>>, vector<1x8x128xf32>
      %26 = vector.shape_cast %25 : vector<1x8x128xf32> to vector<8x128xf32>
      %27 = vector.extract_strided_slice %26 {offsets = [0, 0], sizes = [4, 128], strides = [1, 1]} : vector<8x128xf32> to vector<4x128xf32>
      %28 = vector.extract_strided_slice %1 {offsets = [0, 4], sizes = [4, 1], strides = [1, 1]} : vector<4x23xf32> to vector<4x1xf32>
      %29 = vector.extract_strided_slice %1 {offsets = [0, 5], sizes = [4, 1], strides = [1, 1]} : vector<4x23xf32> to vector<4x1xf32>
      %c0_15 = arith.constant 0 : index
      %c2 = arith.constant 2 : index
      %30 = vector.load %arg11[%c0_15, %c2] : memref<4x8xf32, #tpu.memory_space<vmem>>, vector<4x1xf32>
      %cst = arith.constant 0.00389105058 : f32
      %31 = vector.broadcast %cst : f32 to vector<4x1xf32>
      %32 = arith.mulf %30, %31 : vector<4x1xf32>
      %c0_16 = arith.constant 0 : index
      %c3 = arith.constant 3 : index
      %33 = vector.load %arg11[%c0_16, %c3] : memref<4x8xf32, #tpu.memory_space<vmem>>, vector<4x1xf32>
      %cst_17 = arith.constant 0.00389105058 : f32
      %34 = vector.broadcast %cst_17 : f32 to vector<4x1xf32>
      %35 = arith.mulf %33, %34 : vector<4x1xf32>
      %36 = arith.mulf %32, %32 : vector<4x1xf32>
      %37 = arith.subf %35, %36 : vector<4x1xf32>
      %38 = vector.broadcast %32 : vector<4x1xf32> to vector<4x128xf32>
      %39 = arith.subf %27, %38 : vector<4x128xf32>
      %cst_18 = arith.constant 9.99999974E-6 : f32
      %40 = vector.broadcast %cst_18 : f32 to vector<4x1xf32>
      %41 = arith.addf %37, %40 : vector<4x1xf32>
      %42 = math.rsqrt %41 : vector<4x1xf32>
      %43 = vector.broadcast %42 : vector<4x1xf32> to vector<4x128xf32>
      %44 = arith.mulf %39, %43 : vector<4x128xf32>
      %45 = vector.broadcast %28 : vector<4x1xf32> to vector<4x128xf32>
      %46 = arith.mulf %44, %45 : vector<4x128xf32>
      %47 = vector.broadcast %29 : vector<4x1xf32> to vector<4x128xf32>
      %48 = arith.addf %46, %47 : vector<4x128xf32>
      %49 = math.tanh %48 : vector<4x128xf32>
      %50 = vector.extract_strided_slice %0 {offsets = [16, 0], sizes = [4, 4], strides = [1, 1]} : vector<72x8xf32> to vector<4x4xf32>
      %cst_19 = arith.constant dense<0.000000e+00> : vector<4x128xf32>
      %51 = tpu.matmul %50, %49, %cst_19 {dimension_numbers = #tpu.dot_dimension_numbers<[1], [0], [0], [1], [0, 0, 1, 1], [], []>} : vector<4x4xf32>, vector<4x128xf32>, vector<4x128xf32> -> vector<4x128xf32>
      %52 = vector.extract_strided_slice %1 {offsets = [0, 6], sizes = [4, 1], strides = [1, 1]} : vector<4x23xf32> to vector<4x1xf32>
      %53 = vector.broadcast %52 : vector<4x1xf32> to vector<4x128xf32>
      %54 = arith.addf %51, %53 : vector<4x128xf32>
      %55 = vector.extract_strided_slice %26 {offsets = [4, 0], sizes = [4, 128], strides = [1, 1]} : vector<8x128xf32> to vector<4x128xf32>
      %56 = tpu.concatenate %54, %55 in 0 : vector<4x128xf32>, vector<4x128xf32> -> vector<8x128xf32>
      %57 = arith.index_cast %arg1 : i32 to index
      %c0_20 = arith.constant 0 : index
      %c0_21 = arith.constant 0 : index
      %58 = vector.load %arg10[%57, %c0_20, %c0_21] : memref<3x8x128xf32, #tpu.memory_space<vmem>>, vector<1x8x128xf32>
      %59 = vector.shape_cast %58 : vector<1x8x128xf32> to vector<8x128xf32>
      %60 = vector.shape_cast %56 : vector<8x128xf32> to vector<1x8x128xf32>
      tpu.vector_store %arg10[%57, %c0_20, %c0_21], %60 {strides = array<i32>} : memref<3x8x128xf32, #tpu.memory_space<vmem>>, vector<1x8x128xf32>,
      %61 = tpu.iota {dimensions = array<i32: 1>} : vector<1x128xi32>
      %c128_i32 = arith.constant 128 : i32
      %62 = arith.muli %arg1, %c128_i32 : i32
      %63 = vector.broadcast %62 : i32 to vector<1x128xi32>
      %64 = arith.addi %61, %63 : vector<1x128xi32>
      %c257_i32 = arith.constant 257 : i32
      %65 = vector.broadcast %c257_i32 : i32 to vector<1x128xi32>
      %66 = arith.cmpi slt, %64, %65 : vector<1x128xi32>
      %67 = arith.extui %66 : vector<1x128xi1> to vector<1x128xi32>
      %68 = arith.sitofp %67 : vector<1x128xi32> to vector<1x128xf32>
      %69 = vector.broadcast %68 : vector<1x128xf32> to vector<4x128xf32>
      %70 = arith.mulf %54, %69 : vector<4x128xf32>
      %c0_22 = arith.constant 0 : index
      %c4 = arith.constant 4 : index
      %71 = vector.load %arg11[%c0_22, %c4] : memref<4x8xf32, #tpu.memory_space<vmem>>, vector<4x1xf32>
      %cst_23 = arith.constant dense<0.000000e+00> : vector<4xf32>
      %72 = vector.multi_reduction <add>, %70, %cst_23 [1] : vector<4x128xf32> to vector<4xf32>
      %73 = vector.shape_cast %72 : vector<4xf32> to vector<4x1xf32>
      %74 = arith.addf %71, %73 : vector<4x1xf32>
      %c0_24 = arith.constant 0 : index
      %c4_25 = arith.constant 4 : index
      %75 = vector.load %arg11[%c0_24, %c4_25] : memref<4x8xf32, #tpu.memory_space<vmem>>, vector<4x1xf32>
      tpu.vector_store %arg11[%c0_24, %c4_25], %74 {strides = array<i32>} : memref<4x8xf32, #tpu.memory_space<vmem>>, vector<4x1xf32>,
      %c0_26 = arith.constant 0 : index
      %c5 = arith.constant 5 : index
      %76 = vector.load %arg11[%c0_26, %c5] : memref<4x8xf32, #tpu.memory_space<vmem>>, vector<4x1xf32>
      %77 = arith.mulf %70, %54 : vector<4x128xf32>
      %cst_27 = arith.constant dense<0.000000e+00> : vector<4xf32>
      %78 = vector.multi_reduction <add>, %77, %cst_27 [1] : vector<4x128xf32> to vector<4xf32>
      %79 = vector.shape_cast %78 : vector<4xf32> to vector<4x1xf32>
      %80 = arith.addf %76, %79 : vector<4x1xf32>
      %c0_28 = arith.constant 0 : index
      %c5_29 = arith.constant 5 : index
      %81 = vector.load %arg11[%c0_28, %c5_29] : memref<4x8xf32, #tpu.memory_space<vmem>>, vector<4x1xf32>
      tpu.vector_store %arg11[%c0_28, %c5_29], %80 {strides = array<i32>} : memref<4x8xf32, #tpu.memory_space<vmem>>, vector<4x1xf32>,
    } else {
    }
    %c3_i32 = arith.constant 3 : i32
    %16 = arith.cmpi eq, %arg0, %c3_i32 : i32
    %17 = arith.extui %16 : i1 to i32
    %c0_i32_9 = arith.constant 0 : i32
    %18 = arith.cmpi ne, %17, %c0_i32_9 : i32
    scf.if %18 {
      %24 = arith.index_cast %arg1 : i32 to index
      %c0_13 = arith.constant 0 : index
      %c0_14 = arith.constant 0 : index
      %25 = vector.load %arg10[%24, %c0_13, %c0_14] : memref<3x8x128xf32, #tpu.memory_space<vmem>>, vector<1x8x128xf32>
      %26 = vector.shape_cast %25 : vector<1x8x128xf32> to vector<8x128xf32>
      %27 = vector.extract_strided_slice %26 {offsets = [0, 0], sizes = [4, 128], strides = [1, 1]} : vector<8x128xf32> to vector<4x128xf32>
      %28 = vector.extract_strided_slice %1 {offsets = [0, 7], sizes = [4, 1], strides = [1, 1]} : vector<4x23xf32> to vector<4x1xf32>
      %29 = vector.extract_strided_slice %1 {offsets = [0, 8], sizes = [4, 1], strides = [1, 1]} : vector<4x23xf32> to vector<4x1xf32>
      %c0_15 = arith.constant 0 : index
      %c4 = arith.constant 4 : index
      %30 = vector.load %arg11[%c0_15, %c4] : memref<4x8xf32, #tpu.memory_space<vmem>>, vector<4x1xf32>
      %cst = arith.constant 0.00389105058 : f32
      %31 = vector.broadcast %cst : f32 to vector<4x1xf32>
      %32 = arith.mulf %30, %31 : vector<4x1xf32>
      %c0_16 = arith.constant 0 : index
      %c5 = arith.constant 5 : index
      %33 = vector.load %arg11[%c0_16, %c5] : memref<4x8xf32, #tpu.memory_space<vmem>>, vector<4x1xf32>
      %cst_17 = arith.constant 0.00389105058 : f32
      %34 = vector.broadcast %cst_17 : f32 to vector<4x1xf32>
      %35 = arith.mulf %33, %34 : vector<4x1xf32>
      %36 = arith.mulf %32, %32 : vector<4x1xf32>
      %37 = arith.subf %35, %36 : vector<4x1xf32>
      %38 = vector.broadcast %32 : vector<4x1xf32> to vector<4x128xf32>
      %39 = arith.subf %27, %38 : vector<4x128xf32>
      %cst_18 = arith.constant 9.99999974E-6 : f32
      %40 = vector.broadcast %cst_18 : f32 to vector<4x1xf32>
      %41 = arith.addf %37, %40 : vector<4x1xf32>
      %42 = math.rsqrt %41 : vector<4x1xf32>
      %43 = vector.broadcast %42 : vector<4x1xf32> to vector<4x128xf32>
      %44 = arith.mulf %39, %43 : vector<4x128xf32>
      %45 = vector.broadcast %28 : vector<4x1xf32> to vector<4x128xf32>
      %46 = arith.mulf %44, %45 : vector<4x128xf32>
      %47 = vector.broadcast %29 : vector<4x1xf32> to vector<4x128xf32>
      %48 = arith.addf %46, %47 : vector<4x128xf32>
      %49 = math.tanh %48 : vector<4x128xf32>
      %50 = vector.extract_strided_slice %0 {offsets = [24, 0], sizes = [4, 4], strides = [1, 1]} : vector<72x8xf32> to vector<4x4xf32>
      %cst_19 = arith.constant dense<0.000000e+00> : vector<4x128xf32>
      %51 = tpu.matmul %50, %49, %cst_19 {dimension_numbers = #tpu.dot_dimension_numbers<[1], [0], [0], [1], [0, 0, 1, 1], [], []>} : vector<4x4xf32>, vector<4x128xf32>, vector<4x128xf32> -> vector<4x128xf32>
      %52 = vector.extract_strided_slice %1 {offsets = [0, 9], sizes = [4, 1], strides = [1, 1]} : vector<4x23xf32> to vector<4x1xf32>
      %53 = vector.broadcast %52 : vector<4x1xf32> to vector<4x128xf32>
      %54 = arith.addf %51, %53 : vector<4x128xf32>
      %55 = vector.extract_strided_slice %26 {offsets = [4, 0], sizes = [1, 128], strides = [1, 1]} : vector<8x128xf32> to vector<1x128xf32>
      %56 = vector.broadcast %55 : vector<1x128xf32> to vector<4x128xf32>
      %57 = arith.mulf %54, %56 : vector<4x128xf32>
      %c0_20 = arith.constant 0 : index
      %c0_21 = arith.constant 0 : index
      %58 = vector.load %arg4[%c0_20, %c0_21] : memref<128x1xi32, #tpu.memory_space<vmem>>, vector<128x1xi32>
      %59 = tpu.iota {dimensions = array<i32: 1>} : vector<128x64xi32>
      %60 = vector.broadcast %58 : vector<128x1xi32> to vector<128x64xi32>
      %61 = arith.cmpi eq, %59, %60 : vector<128x64xi32>
      %62 = arith.extui %61 : vector<128x64xi1> to vector<128x64xi32>
      %63 = arith.sitofp %62 : vector<128x64xi32> to vector<128x64xf32>
      %c0_22 = arith.constant 0 : index
      %c0_23 = arith.constant 0 : index
      %64 = vector.load %arg12[%c0_22, %c0_23] : memref<4x64xf32, #tpu.memory_space<vmem>>, vector<4x64xf32>
      %cst_24 = arith.constant dense<0.000000e+00> : vector<4x64xf32>
      %65 = tpu.matmul %57, %63, %cst_24 {dimension_numbers = #tpu.dot_dimension_numbers<[1], [0], [0], [1], [0, 0, 1, 1], [], []>} : vector<4x128xf32>, vector<128x64xf32>, vector<4x64xf32> -> vector<4x64xf32>
      %66 = arith.addf %64, %65 : vector<4x64xf32>
      %c0_25 = arith.constant 0 : index
      %c0_26 = arith.constant 0 : index
      %67 = vector.load %arg12[%c0_25, %c0_26] : memref<4x64xf32, #tpu.memory_space<vmem>>, vector<4x64xf32>
      tpu.vector_store %arg12[%c0_25, %c0_26], %66 {strides = array<i32>} : memref<4x64xf32, #tpu.memory_space<vmem>>, vector<4x64xf32>,
    } else {
    }
    %c3_i32_10 = arith.constant 3 : i32
    %19 = arith.cmpi eq, %arg0, %c3_i32_10 : i32
    %c2_i32_11 = arith.constant 2 : i32
    %20 = arith.cmpi eq, %arg1, %c2_i32_11 : i32
    %21 = arith.andi %19, %20 : i1
    %22 = arith.extui %21 : i1 to i32
    %c0_i32_12 = arith.constant 0 : i32
    %23 = arith.cmpi ne, %22, %c0_i32_12 : i32
    scf.if %23 {
      %c0_13 = arith.constant 0 : index
      %c0_14 = arith.constant 0 : index
      %24 = vector.load %arg5[%c0_13, %c0_14] : memref<4x64xf32, #tpu.memory_space<vmem>>, vector<4x64xf32>
      %c0_15 = arith.constant 0 : index
      %c0_16 = arith.constant 0 : index
      %25 = vector.load %arg12[%c0_15, %c0_16] : memref<4x64xf32, #tpu.memory_space<vmem>>, vector<4x64xf32>
      %26 = tpu.iota {dimensions = array<i32: 0>} : vector<4x64xi32>
      %c2_i32_17 = arith.constant 2 : i32
      %27 = vector.broadcast %c2_i32_17 : i32 to vector<4x64xi32>
      %28 = arith.cmpi sge, %26, %27 : vector<4x64xi32>
      %c0_18 = arith.constant 0 : index
      %c0_19 = arith.constant 0 : index
      %29 = vector.load %arg6[%c0_18, %c0_19] : memref<1x64xf32, #tpu.memory_space<vmem>>, vector<1x64xf32>
      %cst = arith.constant 1.000000e+00 : f32
      %30 = vector.shape_cast %29 : vector<1x64xf32> to vector<1x64xf32>
      %31 = vector.broadcast %30 : vector<1x64xf32> to vector<4x64xf32>
      %32 = vector.broadcast %cst : f32 to vector<4x64xf32>
      %33 = arith.select %28, %31, %32 : vector<4x64xi1>, vector<4x64xf32>
      %34 = arith.mulf %25, %33 : vector<4x64xf32>
      %35 = vector.extract_strided_slice %0 {offsets = [32, 0], sizes = [4, 8], strides = [1, 1]} : vector<72x8xf32> to vector<4x8xf32>
      %36 = vector.extract_strided_slice %35 {offsets = [0, 0], sizes = [4, 4], strides = [1, 1]} : vector<4x8xf32> to vector<4x4xf32>
      %cst_20 = arith.constant dense<0.000000e+00> : vector<4x64xf32>
      %37 = tpu.matmul %36, %24, %cst_20 {dimension_numbers = #tpu.dot_dimension_numbers<[1], [0], [0], [1], [0, 0, 1, 1], [], []>} : vector<4x4xf32>, vector<4x64xf32>, vector<4x64xf32> -> vector<4x64xf32>
      %38 = vector.extract_strided_slice %35 {offsets = [0, 4], sizes = [4, 4], strides = [1, 1]} : vector<4x8xf32> to vector<4x4xf32>
      %cst_21 = arith.constant dense<0.000000e+00> : vector<4x64xf32>
      %39 = tpu.matmul %38, %34, %cst_21 {dimension_numbers = #tpu.dot_dimension_numbers<[1], [0], [0], [1], [0, 0, 1, 1], [], []>} : vector<4x4xf32>, vector<4x64xf32>, vector<4x64xf32> -> vector<4x64xf32>
      %40 = arith.addf %37, %39 : vector<4x64xf32>
      %41 = vector.extract_strided_slice %1 {offsets = [0, 10], sizes = [4, 1], strides = [1, 1]} : vector<4x23xf32> to vector<4x1xf32>
      %42 = vector.broadcast %41 : vector<4x1xf32> to vector<4x64xf32>
      %43 = arith.addf %40, %42 : vector<4x64xf32>
      %44 = vector.extract_strided_slice %1 {offsets = [0, 11], sizes = [4, 1], strides = [1, 1]} : vector<4x23xf32> to vector<4x1xf32>
      %45 = vector.extract_strided_slice %1 {offsets = [0, 12], sizes = [4, 1], strides = [1, 1]} : vector<4x23xf32> to vector<4x1xf32>
      %cst_22 = arith.constant dense<0.000000e+00> : vector<4xf32>
      %46 = vector.multi_reduction <add>, %43, %cst_22 [1] : vector<4x64xf32> to vector<4xf32>
      %47 = vector.shape_cast %46 : vector<4xf32> to vector<4x1xf32>
      %cst_23 = arith.constant 6.400000e+01 : f32
      %48 = vector.broadcast %cst_23 : f32 to vector<4x1xf32>
      %49 = arith.divf %47, %48 : vector<4x1xf32>
      %50 = arith.mulf %43, %43 : vector<4x64xf32>
      %cst_24 = arith.constant dense<0.000000e+00> : vector<4xf32>
      %51 = vector.multi_reduction <add>, %50, %cst_24 [1] : vector<4x64xf32> to vector<4xf32>
      %52 = vector.shape_cast %51 : vector<4xf32> to vector<4x1xf32>
      %cst_25 = arith.constant 6.400000e+01 : f32
      %53 = vector.broadcast %cst_25 : f32 to vector<4x1xf32>
      %54 = arith.divf %52, %53 : vector<4x1xf32>
      %55 = arith.mulf %49, %49 : vector<4x1xf32>
      %56 = arith.subf %54, %55 : vector<4x1xf32>
      %57 = vector.broadcast %49 : vector<4x1xf32> to vector<4x64xf32>
      %58 = arith.subf %43, %57 : vector<4x64xf32>
      %cst_26 = arith.constant 9.99999974E-6 : f32
      %59 = vector.broadcast %cst_26 : f32 to vector<4x1xf32>
      %60 = arith.addf %56, %59 : vector<4x1xf32>
      %61 = math.rsqrt %60 : vector<4x1xf32>
      %62 = vector.broadcast %61 : vector<4x1xf32> to vector<4x64xf32>
      %63 = arith.mulf %58, %62 : vector<4x64xf32>
      %64 = vector.broadcast %44 : vector<4x1xf32> to vector<4x64xf32>
      %65 = arith.mulf %63, %64 : vector<4x64xf32>
      %66 = vector.broadcast %45 : vector<4x1xf32> to vector<4x64xf32>
      %67 = arith.addf %65, %66 : vector<4x64xf32>
      %68 = math.tanh %67 : vector<4x64xf32>
      %69 = vector.extract_strided_slice %0 {offsets = [40, 0], sizes = [4, 4], strides = [1, 1]} : vector<72x8xf32> to vector<4x4xf32>
      %cst_27 = arith.constant dense<0.000000e+00> : vector<4x64xf32>
      %70 = tpu.matmul %69, %68, %cst_27 {dimension_numbers = #tpu.dot_dimension_numbers<[1], [0], [0], [1], [0, 0, 1, 1], [], []>} : vector<4x4xf32>, vector<4x64xf32>, vector<4x64xf32> -> vector<4x64xf32>
      %71 = vector.extract_strided_slice %1 {offsets = [0, 13], sizes = [4, 1], strides = [1, 1]} : vector<4x23xf32> to vector<4x1xf32>
      %72 = vector.broadcast %71 : vector<4x1xf32> to vector<4x64xf32>
      %73 = arith.addf %70, %72 : vector<4x64xf32>
      %74 = vector.extract_strided_slice %1 {offsets = [0, 14], sizes = [4, 1], strides = [1, 1]} : vector<4x23xf32> to vector<4x1xf32>
      %75 = vector.extract_strided_slice %1 {offsets = [0, 15], sizes = [4, 1], strides = [1, 1]} : vector<4x23xf32> to vector<4x1xf32>
      %cst_28 = arith.constant dense<0.000000e+00> : vector<4xf32>
      %76 = vector.multi_reduction <add>, %73, %cst_28 [1] : vector<4x64xf32> to vector<4xf32>
      %77 = vector.shape_cast %76 : vector<4xf32> to vector<4x1xf32>
      %cst_29 = arith.constant 6.400000e+01 : f32
      %78 = vector.broadcast %cst_29 : f32 to vector<4x1xf32>
      %79 = arith.divf %77, %78 : vector<4x1xf32>
      %80 = arith.mulf %73, %73 : vector<4x64xf32>
      %cst_30 = arith.constant dense<0.000000e+00> : vector<4xf32>
      %81 = vector.multi_reduction <add>, %80, %cst_30 [1] : vector<4x64xf32> to vector<4xf32>
      %82 = vector.shape_cast %81 : vector<4xf32> to vector<4x1xf32>
      %cst_31 = arith.constant 6.400000e+01 : f32
      %83 = vector.broadcast %cst_31 : f32 to vector<4x1xf32>
      %84 = arith.divf %82, %83 : vector<4x1xf32>
      %85 = arith.mulf %79, %79 : vector<4x1xf32>
      %86 = arith.subf %84, %85 : vector<4x1xf32>
      %87 = vector.broadcast %79 : vector<4x1xf32> to vector<4x64xf32>
      %88 = arith.subf %73, %87 : vector<4x64xf32>
      %cst_32 = arith.constant 9.99999974E-6 : f32
      %89 = vector.broadcast %cst_32 : f32 to vector<4x1xf32>
      %90 = arith.addf %86, %89 : vector<4x1xf32>
      %91 = math.rsqrt %90 : vector<4x1xf32>
      %92 = vector.broadcast %91 : vector<4x1xf32> to vector<4x64xf32>
      %93 = arith.mulf %88, %92 : vector<4x64xf32>
      %94 = vector.broadcast %74 : vector<4x1xf32> to vector<4x64xf32>
      %95 = arith.mulf %93, %94 : vector<4x64xf32>
      %96 = vector.broadcast %75 : vector<4x1xf32> to vector<4x64xf32>
      %97 = arith.addf %95, %96 : vector<4x64xf32>
      %98 = math.tanh %97 : vector<4x64xf32>
      %99 = vector.extract_strided_slice %0 {offsets = [48, 0], sizes = [4, 4], strides = [1, 1]} : vector<72x8xf32> to vector<4x4xf32>
      %cst_33 = arith.constant dense<0.000000e+00> : vector<4x64xf32>
      %100 = tpu.matmul %99, %98, %cst_33 {dimension_numbers = #tpu.dot_dimension_numbers<[1], [0], [0], [1], [0, 0, 1, 1], [], []>} : vector<4x4xf32>, vector<4x64xf32>, vector<4x64xf32> -> vector<4x64xf32>
      %101 = vector.extract_strided_slice %1 {offsets = [0, 16], sizes = [4, 1], strides = [1, 1]} : vector<4x23xf32> to vector<4x1xf32>
      %102 = vector.broadcast %101 : vector<4x1xf32> to vector<4x64xf32>
      %103 = arith.addf %100, %102 : vector<4x64xf32>
      %104 = vector.extract_strided_slice %1 {offsets = [0, 17], sizes = [4, 1], strides = [1, 1]} : vector<4x23xf32> to vector<4x1xf32>
      %105 = vector.extract_strided_slice %1 {offsets = [0, 18], sizes = [4, 1], strides = [1, 1]} : vector<4x23xf32> to vector<4x1xf32>
      %cst_34 = arith.constant dense<0.000000e+00> : vector<4xf32>
      %106 = vector.multi_reduction <add>, %103, %cst_34 [1] : vector<4x64xf32> to vector<4xf32>
      %107 = vector.shape_cast %106 : vector<4xf32> to vector<4x1xf32>
      %cst_35 = arith.constant 6.400000e+01 : f32
      %108 = vector.broadcast %cst_35 : f32 to vector<4x1xf32>
      %109 = arith.divf %107, %108 : vector<4x1xf32>
      %110 = arith.mulf %103, %103 : vector<4x64xf32>
      %cst_36 = arith.constant dense<0.000000e+00> : vector<4xf32>
      %111 = vector.multi_reduction <add>, %110, %cst_36 [1] : vector<4x64xf32> to vector<4xf32>
      %112 = vector.shape_cast %111 : vector<4xf32> to vector<4x1xf32>
      %cst_37 = arith.constant 6.400000e+01 : f32
      %113 = vector.broadcast %cst_37 : f32 to vector<4x1xf32>
      %114 = arith.divf %112, %113 : vector<4x1xf32>
      %115 = arith.mulf %109, %109 : vector<4x1xf32>
      %116 = arith.subf %114, %115 : vector<4x1xf32>
      %117 = vector.broadcast %109 : vector<4x1xf32> to vector<4x64xf32>
      %118 = arith.subf %103, %117 : vector<4x64xf32>
      %cst_38 = arith.constant 9.99999974E-6 : f32
      %119 = vector.broadcast %cst_38 : f32 to vector<4x1xf32>
      %120 = arith.addf %116, %119 : vector<4x1xf32>
      %121 = math.rsqrt %120 : vector<4x1xf32>
      %122 = vector.broadcast %121 : vector<4x1xf32> to vector<4x64xf32>
      %123 = arith.mulf %118, %122 : vector<4x64xf32>
      %124 = vector.broadcast %104 : vector<4x1xf32> to vector<4x64xf32>
      %125 = arith.mulf %123, %124 : vector<4x64xf32>
      %126 = vector.broadcast %105 : vector<4x1xf32> to vector<4x64xf32>
      %127 = arith.addf %125, %126 : vector<4x64xf32>
      %128 = math.tanh %127 : vector<4x64xf32>
      %129 = vector.extract_strided_slice %0 {offsets = [56, 0], sizes = [4, 4], strides = [1, 1]} : vector<72x8xf32> to vector<4x4xf32>
      %cst_39 = arith.constant dense<0.000000e+00> : vector<4x64xf32>
      %130 = tpu.matmul %129, %128, %cst_39 {dimension_numbers = #tpu.dot_dimension_numbers<[1], [0], [0], [1], [0, 0, 1, 1], [], []>} : vector<4x4xf32>, vector<4x64xf32>, vector<4x64xf32> -> vector<4x64xf32>
      %131 = vector.extract_strided_slice %1 {offsets = [0, 19], sizes = [4, 1], strides = [1, 1]} : vector<4x23xf32> to vector<4x1xf32>
      %132 = vector.broadcast %131 : vector<4x1xf32> to vector<4x64xf32>
      %133 = arith.addf %130, %132 : vector<4x64xf32>
      %134 = vector.extract_strided_slice %1 {offsets = [0, 20], sizes = [4, 1], strides = [1, 1]} : vector<4x23xf32> to vector<4x1xf32>
      %135 = vector.extract_strided_slice %1 {offsets = [0, 21], sizes = [4, 1], strides = [1, 1]} : vector<4x23xf32> to vector<4x1xf32>
      %cst_40 = arith.constant dense<0.000000e+00> : vector<4xf32>
      %136 = vector.multi_reduction <add>, %133, %cst_40 [1] : vector<4x64xf32> to vector<4xf32>
      %137 = vector.shape_cast %136 : vector<4xf32> to vector<4x1xf32>
      %cst_41 = arith.constant 6.400000e+01 : f32
      %138 = vector.broadcast %cst_41 : f32 to vector<4x1xf32>
      %139 = arith.divf %137, %138 : vector<4x1xf32>
      %140 = arith.mulf %133, %133 : vector<4x64xf32>
      %cst_42 = arith.constant dense<0.000000e+00> : vector<4xf32>
      %141 = vector.multi_reduction <add>, %140, %cst_42 [1] : vector<4x64xf32> to vector<4xf32>
      %142 = vector.shape_cast %141 : vector<4xf32> to vector<4x1xf32>
      %cst_43 = arith.constant 6.400000e+01 : f32
      %143 = vector.broadcast %cst_43 : f32 to vector<4x1xf32>
      %144 = arith.divf %142, %143 : vector<4x1xf32>
      %145 = arith.mulf %139, %139 : vector<4x1xf32>
      %146 = arith.subf %144, %145 : vector<4x1xf32>
      %147 = vector.broadcast %139 : vector<4x1xf32> to vector<4x64xf32>
      %148 = arith.subf %133, %147 : vector<4x64xf32>
      %cst_44 = arith.constant 9.99999974E-6 : f32
      %149 = vector.broadcast %cst_44 : f32 to vector<4x1xf32>
      %150 = arith.addf %146, %149 : vector<4x1xf32>
      %151 = math.rsqrt %150 : vector<4x1xf32>
      %152 = vector.broadcast %151 : vector<4x1xf32> to vector<4x64xf32>
      %153 = arith.mulf %148, %152 : vector<4x64xf32>
      %154 = vector.broadcast %134 : vector<4x1xf32> to vector<4x64xf32>
      %155 = arith.mulf %153, %154 : vector<4x64xf32>
      %156 = vector.broadcast %135 : vector<4x1xf32> to vector<4x64xf32>
      %157 = arith.addf %155, %156 : vector<4x64xf32>
      %158 = math.tanh %157 : vector<4x64xf32>
      %159 = vector.extract_strided_slice %0 {offsets = [64, 0], sizes = [2, 4], strides = [1, 1]} : vector<72x8xf32> to vector<2x4xf32>
      %cst_45 = arith.constant dense<0.000000e+00> : vector<2x64xf32>
      %160 = tpu.matmul %159, %158, %cst_45 {dimension_numbers = #tpu.dot_dimension_numbers<[1], [0], [0], [1], [0, 0, 1, 1], [], []>} : vector<2x4xf32>, vector<4x64xf32>, vector<2x64xf32> -> vector<2x64xf32>
      %161 = vector.extract_strided_slice %1 {offsets = [0, 22], sizes = [2, 1], strides = [1, 1]} : vector<4x23xf32> to vector<2x1xf32>
      %162 = vector.broadcast %161 : vector<2x1xf32> to vector<2x64xf32>
      %163 = arith.addf %160, %162 : vector<2x64xf32>
      %c0_46 = arith.constant 0 : index
      %c0_47 = arith.constant 0 : index
      %164 = vector.load %arg9[%c0_46, %c0_47] : memref<2x64xf32, #tpu.memory_space<vmem>>, vector<2x64xf32>
      tpu.vector_store %arg9[%c0_46, %c0_47], %163 {strides = array<i32>} : memref<2x64xf32, #tpu.memory_space<vmem>>, vector<2x64xf32>,
    } else {
    }
    return
  }
  func.func @transform_0(%arg0: i32, %arg1: i32) -> (i32, i32) {
    %c0_i32 = arith.constant 0 : i32
    %c0_i32_0 = arith.constant 0 : i32
    return %c0_i32, %arg1 : i32, i32
  }
  func.func @transform_1(%arg0: i32, %arg1: i32) -> (i32, i32) {
    %c0_i32 = arith.constant 0 : i32
    %c0_i32_0 = arith.constant 0 : i32
    return %c0_i32, %arg1 : i32, i32
  }
  func.func @transform_2(%arg0: i32, %arg1: i32) -> (i32, i32) {
    %c0_i32 = arith.constant 0 : i32
    %c0_i32_0 = arith.constant 0 : i32
    return %arg1, %c0_i32 : i32, i32
  }
  func.func @transform_3(%arg0: i32, %arg1: i32) -> (i32, i32) {
    %c0_i32 = arith.constant 0 : i32
    %c0_i32_0 = arith.constant 0 : i32
    %c0_i32_1 = arith.constant 0 : i32
    return %c0_i32, %c0_i32_0 : i32, i32
  }
  func.func @transform_4(%arg0: i32, %arg1: i32) -> (i32, i32) {
    %c0_i32 = arith.constant 0 : i32
    %c0_i32_0 = arith.constant 0 : i32
    %c0_i32_1 = arith.constant 0 : i32
    return %c0_i32, %c0_i32_0 : i32, i32
  }
  func.func @transform_5(%arg0: i32, %arg1: i32) -> (i32, i32) {
    %c0_i32 = arith.constant 0 : i32
    %c0_i32_0 = arith.constant 0 : i32
    %c0_i32_1 = arith.constant 0 : i32
    return %c0_i32, %c0_i32_0 : i32, i32
  }
  func.func @transform_6(%arg0: i32, %arg1: i32) -> (i32, i32) {
    %c0_i32 = arith.constant 0 : i32
    %c0_i32_0 = arith.constant 0 : i32
    %c0_i32_1 = arith.constant 0 : i32
    return %c0_i32, %c0_i32_0 : i32, i32
  }
  func.func @transform_7(%arg0: i32, %arg1: i32) -> (i32, i32) {
    %c0_i32 = arith.constant 0 : i32
    %c0_i32_0 = arith.constant 0 : i32
    %c0_i32_1 = arith.constant 0 : i32
    return %c0_i32, %c0_i32_0 : i32, i32
  }
}

</mosaic_0001>

<llo_original>
// kernel: tpu_custom_call.1
$region0: #{tpu_custom_call.1}
  #allocation0 [shape = 'u32[]', space=smem, size = 0x4, offset = 0x4, fixed_abs, tag = 'smem constant byte address 0x4 - core index']
  #allocation1 [shape = 'u32[72,128]{1,0:T(1,128)}', space=vmem, size = 0x9000, scoped, tag = 'internal scratch']
  #allocation2 [shape = 'f32[3,8,128]{2,1,0:T(8,128)}', space=vmem, size = 0x3000, scoped, tag = 'scratch operand']
  #allocation3 [shape = 'f32[4,8]{1,0:T(4,128)}', space=vmem, size = 0x800, scoped, tag = 'scratch operand']
  #allocation4 [shape = 'f32[4,64]{1,0:T(4,128)}', space=vmem, size = 0x800, scoped, tag = 'scratch operand']
  %s0 = inlined_call_operand.vmem [shape: s32[1,384], index: 0, kind: input, shape index: {}]
  %s1 = inlined_call_operand.vmem [shape: s32[1,384], index: 1, kind: input, shape index: {}]
  %s2 = inlined_call_operand.vmem [shape: s32[384,1], index: 2, kind: input, shape index: {}]
  %s3 = inlined_call_operand.vmem [shape: f32[4,64], index: 3, kind: input, shape index: {}]
  %s4 = inlined_call_operand.vmem [shape: f32[1,64], index: 4, kind: input, shape index: {}]
  %s5 = inlined_call_operand.vmem [shape: f32[72,8], index: 5, kind: input, shape index: {}]
  %s6 = inlined_call_operand.vmem [shape: f32[4,23], index: 6, kind: input, shape index: {}]
  %s7 = inlined_call_operand.hbm [shape: f32[2,64], index: 7, kind: output, shape index: {}]
  %s8 = sld [smem:[#allocation0]]
  $region85: #{tpu_custom_call.1} parent=0
    _
  %s10 = ssub.s32 1, %s8
  %s11 = scalar_select 0, %s10, %s8
  $region1: #{tpu_custom_call.1} parent=0
    #allocation5 [shape = 'u8[1024]{0}', space=vmem, size = 0x400, scoped, tag = 'output window, operand 0, single buffered']
    #allocation6 [shape = 's32[2]{0}', space=sflag, size = 0x8, scoped, tag = 'scoped memory for tpu_custom_call.1']
    %12 = vsyncpa [#allocation6], 0
    loop: start=0, step=1, limit=14
    $region2: #{tpu_custom_call.1} parent=1 // loop_pre_header
      _
    $region3: #{tpu_custom_call.1} parent=1 // loop_header
      %s14 = sphi 0, %s18
      %p15 = scmp.ge.s32.totalorder %s14, 14
      %s21 = sphi 0, %s33
      %s22 = sphi 0, %s29
      %s23 = sphi 0, %s21
      %s24 = sphi 0, %s22
      %s25 = sphi 0, %s23
      %s26 = sphi 0, %s24
      %s36 = sphi 0, %s38
      %s39 = sphi 0, %s36
      %s40 = sphi 0, %s39
      %s56 = sphi 0, %s40
      %s62 = sphi 0, %s64
      %s65 = sphi 0, %s62
      %s66 = sphi 0, %s65
      %s82 = sphi 0, %s66
      %s88 = sphi 0, %s90
      %s91 = sphi 0, %s88
      %s92 = sphi 0, %s91
      %s108 = sphi 0, %s92
      %s112 = sphi 0, %s112
      %s114 = sphi 0, %s112
      %s115 = sphi 0, %s114
      %s129 = sphi 0, %s115
      %s133 = sphi 0, %s133
      %s135 = sphi 0, %s133
      %s136 = sphi 0, %s135
      %s150 = sphi 0, %s136
      %s154 = sphi 0, %s154
      %s156 = sphi 0, %s154
      %s157 = sphi 0, %s156
      %s171 = sphi 0, %s157
      %s175 = sphi 0, %s175
      %s177 = sphi 0, %s175
      %s178 = sphi 0, %s177
      %s192 = sphi 0, %s178
      %s196 = sphi 0, %s196
      %s198 = sphi 0, %s196
      %s199 = sphi 0, %s198
      %s213 = sphi 0, %s199
    $region4: #{tpu_custom_call.1} parent=1 // loop_header_branch
      %17 = sbr.rel (%p15) target = $region8
    $region5: #{tpu_custom_call.1} parent=1 // loop_body
      %s19 = ssub.s32 %s14, 1
      %s20 = ssub.s32 %s14, 2
      %s27 = sadd.s32 1, %s22
      %p28 = scmp.ge.s32.totalorder %s27, 3
      %s29 = scalar_select %p28, 0, %s27
      %s30 = sadd.s32 1, %s21
      %s31 = scalar_select %p28, %s30, %s21
      %p32 = scmp.ge.s32.totalorder %s31, 4
      %s33 = scalar_select %p32, 0, %s31
      %s34 = ssub.s32 %s22, %s29
      %p35 = scmp.eq.s32.totalorder %s34, 0
      %s37 = sadd.s32 %s36, 1
      %s38 = scalar_select %p35, %s36, %s37
      %p41 = pneg %p35
      %p42 = scmp.eq.s32.totalorder %s14, 11
      %p43 = por %p41, %p42
      %p44 = scmp.ne.s32.totalorder %s36, %s39
      %p45 = scmp.eq.s32.totalorder %s14, 0
      %p46 = por %p44, %p45
      %p47 = scmp.ne.s32.totalorder %s36, %s39
      %p48 = scmp.eq.s32.totalorder %s19, 11
      %p49 = por %p47, %p48
      %p50 = scmp.ne.s32.totalorder %s39, %s40
      %p51 = scmp.eq.s32.totalorder %s19, 0
      %p52 = por %p50, %p51
      %p53 = scmp.ne.s32.totalorder %s39, %s40
      %p54 = scmp.eq.s32.totalorder %s20, 11
      %p55 = por %p53, %p54
      %p57 = scmp.ne.s32.totalorder %s40, %s56
      %p58 = scmp.eq.s32.totalorder %s20, 0
      %p59 = por %p57, %p58
      %s60 = ssub.s32 %s22, %s29
      %p61 = scmp.eq.s32.totalorder %s60, 0
      %s63 = sadd.s32 %s62, 1
      %s64 = scalar_select %p61, %s62, %s63
      %p67 = pneg %p61
      %p68 = scmp.eq.s32.totalorder %s14, 11
      %p69 = por %p67, %p68
      %p70 = scmp.ne.s32.totalorder %s62, %s65
      %p71 = scmp.eq.s32.totalorder %s14, 0
      %p72 = por %p70, %p71
      %p73 = scmp.ne.s32.totalorder %s62, %s65
      %p74 = scmp.eq.s32.totalorder %s19, 11
      %p75 = por %p73, %p74
      %p76 = scmp.ne.s32.totalorder %s65, %s66
      %p77 = scmp.eq.s32.totalorder %s19, 0
      %p78 = por %p76, %p77
      %p79 = scmp.ne.s32.totalorder %s65, %s66
      %p80 = scmp.eq.s32.totalorder %s20, 11
      %p81 = por %p79, %p80
      %p83 = scmp.ne.s32.totalorder %s66, %s82
      %p84 = scmp.eq.s32.totalorder %s20, 0
      %p85 = por %p83, %p84
      %s86 = ssub.s32 %s22, %s29
      %p87 = scmp.eq.s32.totalorder %s86, 0
      %s89 = sadd.s32 %s88, 1
      %s90 = scalar_select %p87, %s88, %s89
      %p93 = pneg %p87
      %p94 = scmp.eq.s32.totalorder %s14, 11
      %p95 = por %p93, %p94
      %p96 = scmp.ne.s32.totalorder %s88, %s91
      %p97 = scmp.eq.s32.totalorder %s14, 0
      %p98 = por %p96, %p97
      %p99 = scmp.ne.s32.totalorder %s88, %s91
      %p100 = scmp.eq.s32.totalorder %s19, 11
      %p101 = por %p99, %p100
      %p102 = scmp.ne.s32.totalorder %s91, %s92
      %p103 = scmp.eq.s32.totalorder %s19, 0
      %p104 = por %p102, %p103
      %p105 = scmp.ne.s32.totalorder %s91, %s92
      %p106 = scmp.eq.s32.totalorder %s20, 11
      %p107 = por %p105, %p106
      %p109 = scmp.ne.s32.totalorder %s92, %s108
      %p110 = scmp.eq.s32.totalorder %s20, 0
      %p111 = por %p109, %p110
      %s113 = sadd.s32 %s112, 1
      %p116 = scmp.eq.s32.totalorder %s14, 11
      %p117 = scmp.ne.s32.totalorder %s112, %s114
      %p118 = scmp.eq.s32.totalorder %s14, 0
      %p119 = por %p117, %p118
      %p120 = scmp.ne.s32.totalorder %s112, %s114
      %p121 = scmp.eq.s32.totalorder %s19, 11
      %p122 = por %p120, %p121
      %p123 = scmp.ne.s32.totalorder %s114, %s115
      %p124 = scmp.eq.s32.totalorder %s19, 0
      %p125 = por %p123, %p124
      %p126 = scmp.ne.s32.totalorder %s114, %s115
      %p127 = scmp.eq.s32.totalorder %s20, 11
      %p128 = por %p126, %p127
      %p130 = scmp.ne.s32.totalorder %s115, %s129
      %p131 = scmp.eq.s32.totalorder %s20, 0
      %p132 = por %p130, %p131
      %s134 = sadd.s32 %s133, 1
      %p137 = scmp.eq.s32.totalorder %s14, 11
      %p138 = scmp.ne.s32.totalorder %s133, %s135
      %p139 = scmp.eq.s32.totalorder %s14, 0
      %p140 = por %p138, %p139
      %p141 = scmp.ne.s32.totalorder %s133, %s135
      %p142 = scmp.eq.s32.totalorder %s19, 11
      %p143 = por %p141, %p142
      %p144 = scmp.ne.s32.totalorder %s135, %s136
      %p145 = scmp.eq.s32.totalorder %s19, 0
      %p146 = por %p144, %p145
      %p147 = scmp.ne.s32.totalorder %s135, %s136
      %p148 = scmp.eq.s32.totalorder %s20, 11
      %p149 = por %p147, %p148
      %p151 = scmp.ne.s32.totalorder %s136, %s150
      %p152 = scmp.eq.s32.totalorder %s20, 0
      %p153 = por %p151, %p152
      %s155 = sadd.s32 %s154, 1
      %p158 = scmp.eq.s32.totalorder %s14, 11
      %p159 = scmp.ne.s32.totalorder %s154, %s156
      %p160 = scmp.eq.s32.totalorder %s14, 0
      %p161 = por %p159, %p160
      %p162 = scmp.ne.s32.totalorder %s154, %s156
      %p163 = scmp.eq.s32.totalorder %s19, 11
      %p164 = por %p162, %p163
      %p165 = scmp.ne.s32.totalorder %s156, %s157
      %p166 = scmp.eq.s32.totalorder %s19, 0
      %p167 = por %p165, %p166
      %p168 = scmp.ne.s32.totalorder %s156, %s157
      %p169 = scmp.eq.s32.totalorder %s20, 11
      %p170 = por %p168, %p169
      %p172 = scmp.ne.s32.totalorder %s157, %s171
      %p173 = scmp.eq.s32.totalorder %s20, 0
      %p174 = por %p172, %p173
      %s176 = sadd.s32 %s175, 1
      %p179 = scmp.eq.s32.totalorder %s14, 11
      %p180 = scmp.ne.s32.totalorder %s175, %s177
      %p181 = scmp.eq.s32.totalorder %s14, 0
      %p182 = por %p180, %p181
      %p183 = scmp.ne.s32.totalorder %s175, %s177
      %p184 = scmp.eq.s32.totalorder %s19, 11
      %p185 = por %p183, %p184
      %p186 = scmp.ne.s32.totalorder %s177, %s178
      %p187 = scmp.eq.s32.totalorder %s19, 0
      %p188 = por %p186, %p187
      %p189 = scmp.ne.s32.totalorder %s177, %s178
      %p190 = scmp.eq.s32.totalorder %s20, 11
      %p191 = por %p189, %p190
      %p193 = scmp.ne.s32.totalorder %s178, %s192
      %p194 = scmp.eq.s32.totalorder %s20, 0
      %p195 = por %p193, %p194
      %s197 = sadd.s32 %s196, 1
      %p200 = scmp.eq.s32.totalorder %s14, 11
      %p201 = scmp.ne.s32.totalorder %s196, %s198
      %p202 = scmp.eq.s32.totalorder %s14, 0
      %p203 = por %p201, %p202
      %p204 = scmp.ne.s32.totalorder %s196, %s198
      %p205 = scmp.eq.s32.totalorder %s19, 11
      %p206 = por %p204, %p205
      %p207 = scmp.ne.s32.totalorder %s198, %s199
      %p208 = scmp.eq.s32.totalorder %s19, 0
      %p209 = por %p207, %p208
      %p210 = scmp.ne.s32.totalorder %s198, %s199
      %p211 = scmp.eq.s32.totalorder %s20, 11
      %p212 = por %p210, %p211
      %p214 = scmp.ne.s32.totalorder %s199, %s213
      %p215 = scmp.eq.s32.totalorder %s20, 0
      %p216 = por %p214, %p215
      %p217 = scmp.le.s32.totalorder 1, %s14
      %p218 = scmp.lt.s32.totalorder %s14, 13
      %p219 = pnand %p217, %p218
      %p220 = pneg %p219
      // Predicated region
      $region9: #{tpu_custom_call.1} parent=5 // pred_check
        _
      $region10: #{tpu_custom_call.1} parent=5 // pred_check_branch
        %222 = sbr.rel (%p219) target = $region12
      $region11: #{tpu_custom_call.1} parent=5 // pred_region
        %s223 = ssub.s32 %s14, 1
        // Predicated region
        $region13: #{tpu_custom_call.1} parent=11 // pred_check
          %p224 = pneg %p125
        $region14: #{tpu_custom_call.1} parent=11 // pred_check_branch
          %226 = sbr.rel (%p224) target = $region16
        $region15: #{tpu_custom_call.1} parent=11 // pred_region
          _
        $region16: #{tpu_custom_call.1} parent=11 // pred_fallthru
          _
        // Predicated region
        $region17: #{tpu_custom_call.1} parent=11 // pred_check
          %p227 = pneg %p146
        $region18: #{tpu_custom_call.1} parent=11 // pred_check_branch
          %229 = sbr.rel (%p227) target = $region20
        $region19: #{tpu_custom_call.1} parent=11 // pred_region
          _
        $region20: #{tpu_custom_call.1} parent=11 // pred_fallthru
          _
        // Predicated region
        $region21: #{tpu_custom_call.1} parent=11 // pred_check
          %p230 = pneg %p167
        $region22: #{tpu_custom_call.1} parent=11 // pred_check_branch
          %232 = sbr.rel (%p230) target = $region24
        $region23: #{tpu_custom_call.1} parent=11 // pred_region
          _
        $region24: #{tpu_custom_call.1} parent=11 // pred_fallthru
          _
        // Predicated region
        $region25: #{tpu_custom_call.1} parent=11 // pred_check
          %p233 = pneg %p188
        $region26: #{tpu_custom_call.1} parent=11 // pred_check_branch
          %235 = sbr.rel (%p233) target = $region28
        $region27: #{tpu_custom_call.1} parent=11 // pred_region
          _
        $region28: #{tpu_custom_call.1} parent=11 // pred_fallthru
          _
      $region12: #{tpu_custom_call.1} parent=5 // pred_fallthru
        _
      %p236 = scmp.lt.s32.totalorder %s14, 12
      // Predicated region
      $region29: #{tpu_custom_call.1} parent=5 // pred_check
        %p237 = pneg %p236
      $region30: #{tpu_custom_call.1} parent=5 // pred_check_branch
        %239 = sbr.rel (%p237) target = $region32
      $region31: #{tpu_custom_call.1} parent=5 // pred_region
        // Predicated region
        $region33: #{tpu_custom_call.1} parent=31 // pred_check
          %p240 = pneg %p46
        $region34: #{tpu_custom_call.1} parent=31 // pred_check_branch
          %242 = sbr.rel (%p240) target = $region36
        $region35: #{tpu_custom_call.1} parent=31 // pred_region
          %p243 = scmp.lt.s32.totalorder %s22, 2
          %s244 = scalar_select %p243, %s22, 2
          %s245 = scalar_lea.vmem %s0, %s244
        $region36: #{tpu_custom_call.1} parent=31 // pred_fallthru
          _
        // Predicated region
        $region37: #{tpu_custom_call.1} parent=31 // pred_check
          %p246 = pneg %p72
        $region38: #{tpu_custom_call.1} parent=31 // pred_check_branch
          %248 = sbr.rel (%p246) target = $region40
        $region39: #{tpu_custom_call.1} parent=31 // pred_region
          %p249 = scmp.lt.s32.totalorder %s22, 2
          %s250 = scalar_select %p249, %s22, 2
          %s251 = scalar_lea.vmem %s1, %s250
        $region40: #{tpu_custom_call.1} parent=31 // pred_fallthru
          _
        // Predicated region
        $region41: #{tpu_custom_call.1} parent=31 // pred_check
          %p252 = pneg %p98
        $region42: #{tpu_custom_call.1} parent=31 // pred_check_branch
          %254 = sbr.rel (%p252) target = $region44
        $region43: #{tpu_custom_call.1} parent=31 // pred_region
          %s255 = smul.u32 16, %s22
          %p256 = scmp.lt.s32.totalorder %s255, 47
          %s257 = scalar_select %p256, %s255, 47
          %s258 = smul.addr %s257, 8
          %s259 = scalar_lea.vmem %s2, %s258
          %s260 = smul.u32 16, %s22
        $region44: #{tpu_custom_call.1} parent=31 // pred_fallthru
          _
      $region32: #{tpu_custom_call.1} parent=5 // pred_fallthru
        _
      %p261 = scmp.le.s32.totalorder 1, %s14
      %p262 = scmp.lt.s32.totalorder %s14, 13
      %p263 = pnand %p261, %p262
      %p264 = pneg %p263
      // Predicated region
      $region45: #{tpu_custom_call.1} parent=5 // pred_check
        _
      $region46: #{tpu_custom_call.1} parent=5 // pred_check_branch
        %266 = sbr.rel (%p263) target = $region48
      $region47: #{tpu_custom_call.1} parent=5 // pred_region
        %s267 = ssub.s32 %s14, 1
        %p268 = scmp.lt.s32.totalorder %s24, 2
        %s269 = scalar_select %p268, %s24, 2
        %s270 = scalar_lea.vmem %s0, %s269
        %p271 = pneg %p52
        %p272 = pneg %p49
        %p273 = scmp.lt.s32.totalorder %s24, 2
        %s274 = scalar_select %p273, %s24, 2
        %s275 = scalar_lea.vmem %s1, %s274
        %p276 = pneg %p78
        %p277 = pneg %p75
        %s278 = smul.u32 16, %s24
        %p279 = scmp.lt.s32.totalorder %s278, 47
        %s280 = scalar_select %p279, %s278, 47
        %s281 = smul.addr %s280, 8
        %s282 = scalar_lea.vmem %s2, %s281
        %p283 = pneg %p104
        %p284 = pneg %p101
        %p285 = pneg %p125
        %p286 = pneg %p122
        %p287 = pneg %p146
        %p288 = pneg %p143
        %p289 = pneg %p167
        %p290 = pneg %p164
        %p291 = pneg %p188
        %p292 = pneg %p185
        %p293 = pneg %p209
        %p294 = pneg %p206
        %p295 = scmp.lt.s32.totalorder %s24, 2
        %s296 = scalar_select %p295, %s24, 2
        %s297 = scalar_lea.vmem %s0, %s296
        %p298 = scmp.lt.s32.totalorder %s24, 2
        %s299 = scalar_select %p298, %s24, 2
        %s300 = scalar_lea.vmem %s1, %s299
        %s301 = smul.u32 16, %s24
        %p302 = scmp.lt.s32.totalorder %s301, 47
        %s303 = scalar_select %p302, %s301, 47
        %s304 = smul.addr %s303, 8
        %s305 = scalar_lea.vmem %s2, %s304
        %s306 = smul.u32 16, %s24
        %v307 = vld [vmem:[%s5] sm:$0xff]
        %v308 = vld [vmem:[%s5 + $0x8] sm:$0xff]
        %v309 = vld [vmem:[%s5 + $0x10] sm:$0xff]
        %v310 = vld [vmem:[%s5 + $0x18] sm:$0xff]
        %v311 = vld [vmem:[%s5 + $0x20] sm:$0xff]
        %v312 = vld [vmem:[%s5 + $0x28] sm:$0xff]
        %v313 = vld [vmem:[%s5 + $0x30] sm:$0xff]
        %v314 = vld [vmem:[%s5 + $0x38] sm:$0xff]
        %v315 = vld [vmem:[%s5 + $0x40] sm:$0xff]
        %v316 = vld [vmem:[%s6] sm:$0xf]
        %p317 = scmp.eq.s32.totalorder %s23, 0
        %p318 = scmp.eq.s32.totalorder %s24, 0
        %p319 = pnand %p317, %p318
        %p320 = pneg %p319
        // Predicated region
        $region49: #{tpu_custom_call.1} parent=47 // pred_check
          _
        $region50: #{tpu_custom_call.1} parent=47 // pred_check_branch
          %322 = sbr.rel (%p319) target = $region52
        $region51: #{tpu_custom_call.1} parent=47 // pred_region
          %vm323 = vcmask 60416
          %324 = vst.msk [vmem:[#allocation3] sm:$0xf] %vm323, 0.0
          %vm325 = vcmask 519168
          %326 = vst.msk [vmem:[#allocation4] sm:$0xf] %vm325, 0.0
        $region52: #{tpu_custom_call.1} parent=47 // pred_fallthru
          _
        // Predicated region
        $region53: #{tpu_custom_call.1} parent=47 // pred_check
          %p327 = pneg %p317
        $region54: #{tpu_custom_call.1} parent=47 // pred_check_branch
          %329 = sbr.rel (%p327) target = $region56
        $region55: #{tpu_custom_call.1} parent=47 // pred_region
          %v330 = vld [vmem:[%s300] sm:$0x1]
          %v331 = vld [vmem:[%s297] sm:$0x1]
          %v332 = vlaneseq
          %v333 = vshrl.u32 %v332, 7
          %v334 = vadd.s32 %v333, 8
          %v335 = vadd.s32 %v333, 16
          %v336 = vadd.s32 %v333, 24
          %v337 = vadd.s32 %v333, 32
          %v338 = vadd.s32 %v333, 40
          %v339 = vadd.s32 %v333, 48
          %v340 = vadd.s32 %v333, 56
          %v341 = vperm.slane %v330, 0
          %vm342 = vcmp.eq.s32.totalorder %v333, %v341
          %vm343 = vcmp.eq.s32.totalorder %v334, %v341
          %vm344 = vcmp.eq.s32.totalorder %v335, %v341
          %vm345 = vcmp.eq.s32.totalorder %v336, %v341
          %vm346 = vcmp.eq.s32.totalorder %v337, %v341
          %vm347 = vcmp.eq.s32.totalorder %v338, %v341
          %vm348 = vcmp.eq.s32.totalorder %v339, %v341
          %vm349 = vcmp.eq.s32.totalorder %v340, %v341
          %v350 = vsel %vm342, 1, 0
          %v351 = vsel %vm343, 1, 0
          %v352 = vsel %vm344, 1, 0
          %v353 = vsel %vm345, 1, 0
          %v354 = vsel %vm346, 1, 0
          %v355 = vsel %vm347, 1, 0
          %v356 = vsel %vm348, 1, 0
          %v357 = vsel %vm349, 1, 0
          %v358 = vcvt.s32.f32 %v350
          %v359 = vcvt.s32.f32 %v351
          %v360 = vcvt.s32.f32 %v352
          %v361 = vcvt.s32.f32 %v353
          %v362 = vcvt.s32.f32 %v354
          %v363 = vcvt.s32.f32 %v355
          %v364 = vcvt.s32.f32 %v356
          %v365 = vcvt.s32.f32 %v357
          %v366 = vperm.slane %v331, 0
          %vm367 = vcmp.eq.s32.totalorder %v333, %v366
          %vm368 = vcmp.eq.s32.totalorder %v334, %v366
          %vm369 = vcmp.eq.s32.totalorder %v335, %v366
          %vm370 = vcmp.eq.s32.totalorder %v336, %v366
          %vm371 = vcmp.eq.s32.totalorder %v337, %v366
          %vm372 = vcmp.eq.s32.totalorder %v338, %v366
          %vm373 = vcmp.eq.s32.totalorder %v339, %v366
          %vm374 = vcmp.eq.s32.totalorder %v340, %v366
          %v375 = vsel %vm367, 1, 0
          %v376 = vsel %vm368, 1, 0
          %v377 = vsel %vm369, 1, 0
          %v378 = vsel %vm370, 1, 0
          %v379 = vsel %vm371, 1, 0
          %v380 = vsel %vm372, 1, 0
          %v381 = vsel %vm373, 1, 0
          %v382 = vsel %vm374, 1, 0
          %v383 = vcvt.s32.f32 %v375
          %v384 = vcvt.s32.f32 %v376
          %v385 = vcvt.s32.f32 %v377
          %v386 = vcvt.s32.f32 %v378
          %v387 = vcvt.s32.f32 %v379
          %v388 = vcvt.s32.f32 %v380
          %v389 = vcvt.s32.f32 %v381
          %v390 = vcvt.s32.f32 %v382
          %v391 = vsub.f32 %v358, %v383
          %v392 = vsub.f32 %v359, %v384
          %v393 = vsub.f32 %v360, %v385
          %v394 = vsub.f32 %v361, %v386
          %v395 = vsub.f32 %v362, %v387
          %v396 = vsub.f32 %v363, %v388
          %v397 = vsub.f32 %v364, %v389
          %v398 = vsub.f32 %v365, %v390
          %v399 = vld [vmem:[%s3] sm:$0xf]
          %vm400 = vcmask 523264
          %v402 = vsel %vm400, %v399, 0
          %404 = vmatpush.msra.mxu0 0.0
          %405 = vmatpush.msra.mxu0 0.0
          %406 = vmatpush.msra.mxu0 0.0
          %407 = vmatpush.msra.mxu0 0.0
          %408 = vmatpush.msra.mxu0 0.0
          %409 = vmatpush.msra.mxu0 0.0
          %410 = vmatpush.msra.mxu0 0.0
          %411 = vmatpush.msra.mxu0 0.0
          %412 = vmatpush.msra.mxu0 %v398
          %413 = vmatpush.msra.mxu0 %v397
          %414 = vmatpush.msra.mxu0 %v396
          %415 = vmatpush.msra.mxu0 %v395
          %416 = vmatpush.msra.mxu0 %v394
          %417 = vmatpush.msra.mxu0 %v393
          %418 = vmatpush.msra.mxu0 %v392
          %419 = vmatpush.msra.mxu0 %v391
          %420 = vmatmul.f32.gmra.mxu0 %v402
          %v421 = vpop.f32.mrf.mxu0
          %v422 = vadd.f32 0.0, %v421
          %423 = vdwg.mxu0
          %vm424 = vcmp.eq.f32.partialorder %v422, 0.0
          %v425 = vsel %vm424, 1.0, 0.0
          %vm426 = vcmask 1043456
          %v427 = vsel %vm426, %v425, inf
          %v428 = vrot.slane %v427, 4
          %v429 = vmin.f32 %v427, %v428
          %v430 = vrot.slane %v429, 2
          %v431 = vmin.f32 %v429, %v430
          %v432 = vrot.slane %v431, 1
          %v433 = vmin.f32 %v431, %v432
          %vm434 = vcmp.gt.f32.partialorder %v433, 0.0
          %v435 = vsel %vm434, 0.0, 1.0
          %437 = vset.pattern.permute.xlu0 0
          %438 = vperm.xlu0 %437, %v316
          %v439 = vpop.permute.xlu0 %438
          %vm441 = vcmask 31744
          %v443 = vsel %vm441, %v307, 0
          %v446 = vsel %vm426, %v422, 0
          %448 = vmatpush.msra.mxu0 0.0
          %449 = vmatpush.msra.mxu0 0.0
          %450 = vmatpush.msra.mxu0 0.0
          %451 = vmatpush.msra.mxu0 0.0
          %452 = vmatpush.msra.mxu0 0.0
          %453 = vmatpush.msra.mxu0 0.0
          %454 = vmatpush.msra.mxu0 0.0
          %455 = vmatpush.msra.mxu0 0.0
          %456 = vmatpush.msra.mxu0 0.0
          %457 = vmatpush.msra.mxu0 0.0
          %458 = vmatpush.msra.mxu0 0.0
          %459 = vmatpush.msra.mxu0 0.0
          %460 = vmatpush.msra.mxu0 0.0
          %461 = vmatpush.msra.mxu0 0.0
          %462 = vmatpush.msra.mxu0 0.0
          %463 = vmatpush.msra.mxu0 %v446
          %464 = vmatmul.f32.gmra.mxu0 %v443
          %v465 = vpop.f32.mrf.mxu0
          %v466 = vadd.f32 %v439, %v465
          %467 = vdwg.mxu0
          %v468 = vsel %vm426, %v466, %v435
          %vm469 = vcmask 1044480
          %v470 = vsel %vm469, %v468, 0.0
          %s471 = smul.u32 %s24, 8
          %s472 = scalar_lea.vmem [#allocation2], %s471
          %473 = vst [vmem:[%s472] sm:$0xff] %v470
          %v474 = vlaneseq
          %v475 = vand.u32 %v474, 127
          %s476 = smul.u32 %s24, 128
          %v477 = vstv %s476
          %v478 = vadd.s32 %v475, %v477
          %vm479 = vcmp.lt.s32.totalorder %v478, 257
          %v480 = vsel %vm479, 1, 0
          %v481 = vcvt.s32.f32 %v480
          %v482 = vmul.f32 %v466, %v481
          %v483 = vld [vmem:[#allocation3] sm:$0xf]
          %v484 = vsel %vm426, %v482, 0.0
          %485 = vadd.xlane.f32.xlu0 %v484
          %v486 = vpop.xlane.xlu0 %485
          %v487 = vadd.f32 %v483, %v486
          %vm488 = vcmask 3072
          %489 = vst.msk [vmem:[#allocation3] sm:$0xf] %vm488, %v487
          %v490 = vld [vmem:[#allocation3] sm:$0xf]
          %v491 = vmul.f32 %v482, %v466
          %v492 = vsel %vm426, %v491, 0.0
          %493 = vadd.xlane.f32.xlu0 %v492
          %v494 = vpop.xlane.xlu0 %493
          %v495 = vadd.f32 %v490, %v494
          %vm496 = vcmask 11272
          %497 = vst.msk [vmem:[#allocation3] sm:$0xf] %vm496, %v495
        $region56: #{tpu_custom_call.1} parent=47 // pred_fallthru
          _
        %p498 = scmp.eq.s32.totalorder %s23, 1
        // Predicated region
        $region57: #{tpu_custom_call.1} parent=47 // pred_check
          %p499 = pneg %p498
        $region58: #{tpu_custom_call.1} parent=47 // pred_check_branch
          %501 = sbr.rel (%p499) target = $region60
        $region59: #{tpu_custom_call.1} parent=47 // pred_region
          %s502 = smul.u32 %s24, 8
          %s503 = scalar_lea.vmem [#allocation2], %s502
          %v504 = vld [vmem:[%s503] sm:$0xff]
          %v505 = vld [vmem:[#allocation3] sm:$0xf]
          %v506 = vmul.f32 %v505, 0.0038910506
          %v507 = vmul.f32 %v506, %v506
          %509 = vrot.lane.b32.xlu0 %v507, 1
          %v510 = vpop.permute.xlu0 %509
          %v512 = vsub.f32 %v506, %v510
          %514 = vset.pattern.permute.xlu0 0
          %515 = vperm.xlu0 %514, %v506
          %v516 = vpop.permute.xlu0 %515
          %v518 = vsub.f32 %v504, %v516
          %v519 = vadd.f32 %v512, 1e-05
          %v520 = vrsqrt.pop %v519
          %v521 = vmul.f32 %v520, %v519
          %v522 = vmul.f32 %v521, %v520
          %v523 = vmul.f32 0.5, %v522
          %v524 = vsub.f32 1.5, %v523
          %v525 = vmul.f32 %v520, %v524
          %vm526 = vweird.f32 %v519
          %vm527 = vweird.f32 %v520
          %vm528 = vmor %vm526, %vm527
          %v529 = vsel %vm528, %v520, %v525
          %531 = vset.pattern.permute.xlu0 1
          %532 = vperm.xlu0 %531, %v529
          %v533 = vpop.permute.xlu0 %532
          %v535 = vmul.f32 %v518, %v533
          %537 = vset.pattern.permute.xlu0 1
          %538 = vperm.xlu0 %537, %v316
          %v539 = vpop.permute.xlu0 %538
          %v541 = vmul.f32 %v535, %v539
          %542 = vset.pattern.permute.xlu0 2
          %543 = vperm.xlu0 %542, %v316
          %v544 = vpop.permute.xlu0 %543
          %v546 = vadd.f32 %v541, %v544
          %v547 = vtanh.pop %v546
          %548 = vset.pattern.permute.xlu0 3
          %549 = vperm.xlu0 %548, %v316
          %v550 = vpop.permute.xlu0 %549
          %vm552 = vcmask 31744
          %v554 = vsel %vm552, %v308, 0
          %vm556 = vcmask 1043456
          %v558 = vsel %vm556, %v547, 0
          %560 = vmatpush.msra.mxu0 0.0
          %561 = vmatpush.msra.mxu0 0.0
          %562 = vmatpush.msra.mxu0 0.0
          %563 = vmatpush.msra.mxu0 0.0
          %564 = vmatpush.msra.mxu0 0.0
          %565 = vmatpush.msra.mxu0 0.0
          %566 = vmatpush.msra.mxu0 0.0
          %567 = vmatpush.msra.mxu0 0.0
          %568 = vmatpush.msra.mxu0 0.0
          %569 = vmatpush.msra.mxu0 0.0
          %570 = vmatpush.msra.mxu0 0.0
          %571 = vmatpush.msra.mxu0 0.0
          %572 = vmatpush.msra.mxu0 0.0
          %573 = vmatpush.msra.mxu0 0.0
          %574 = vmatpush.msra.mxu0 0.0
          %575 = vmatpush.msra.mxu0 %v558
          %576 = vmatmul.f32.gmra.mxu0 %v554
          %v577 = vpop.f32.mrf.mxu0
          %v578 = vadd.f32 %v550, %v577
          %579 = vdwg.mxu0
          %v580 = vsel %vm556, %v578, %v504
          %581 = vst [vmem:[%s503] sm:$0xff] %v580
          %v582 = vlaneseq
          %v583 = vand.u32 %v582, 127
          %s584 = smul.u32 %s24, 128
          %v585 = vstv %s584
          %v586 = vadd.s32 %v583, %v585
          %vm587 = vcmp.lt.s32.totalorder %v586, 257
          %v588 = vsel %vm587, 1, 0
          %v589 = vcvt.s32.f32 %v588
          %v590 = vmul.f32 %v578, %v589
          %v591 = vld [vmem:[#allocation3] sm:$0xf]
          %v592 = vsel %vm556, %v590, 0.0
          %593 = vadd.xlane.f32.xlu0 %v592
          %v594 = vpop.xlane.xlu0 %593
          %v595 = vadd.f32 %v591, %v594
          %vm596 = vcmask 19472
          %597 = vst.msk [vmem:[#allocation3] sm:$0xf] %vm596, %v595
          %v598 = vld [vmem:[#allocation3] sm:$0xf]
          %v599 = vmul.f32 %v590, %v578
          %v600 = vsel %vm556, %v599, 0.0
          %601 = vadd.xlane.f32.xlu0 %v600
          %v602 = vpop.xlane.xlu0 %601
          %v603 = vadd.f32 %v598, %v602
          %vm604 = vcmask 27672
          %605 = vst.msk [vmem:[#allocation3] sm:$0xf] %vm604, %v603
        $region60: #{tpu_custom_call.1} parent=47 // pred_fallthru
          _
        %p606 = scmp.eq.s32.totalorder %s23, 2
        // Predicated region
        $region61: #{tpu_custom_call.1} parent=47 // pred_check
          %p607 = pneg %p606
        $region62: #{tpu_custom_call.1} parent=47 // pred_check_branch
          %609 = sbr.rel (%p607) target = $region64
        $region63: #{tpu_custom_call.1} parent=47 // pred_region
          %s610 = smul.u32 %s24, 8
          %s611 = scalar_lea.vmem [#allocation2], %s610
          %v612 = vld [vmem:[%s611] sm:$0xff]
          %v613 = vld [vmem:[#allocation3] sm:$0xf]
          %v614 = vmul.f32 %v613, 0.0038910506
          %v615 = vmul.f32 %v614, %v614
          %617 = vrot.lane.b32.xlu0 %v615, 1
          %v618 = vpop.permute.xlu0 %617
          %v620 = vsub.f32 %v614, %v618
          %622 = vset.pattern.permute.xlu0 2
          %623 = vperm.xlu0 %622, %v614
          %v624 = vpop.permute.xlu0 %623
          %v626 = vsub.f32 %v612, %v624
          %v627 = vadd.f32 %v620, 1e-05
          %v628 = vrsqrt.pop %v627
          %v629 = vmul.f32 %v628, %v627
          %v630 = vmul.f32 %v629, %v628
          %v631 = vmul.f32 0.5, %v630
          %v632 = vsub.f32 1.5, %v631
          %v633 = vmul.f32 %v628, %v632
          %vm634 = vweird.f32 %v627
          %vm635 = vweird.f32 %v628
          %vm636 = vmor %vm634, %vm635
          %v637 = vsel %vm636, %v628, %v633
          %639 = vset.pattern.permute.xlu0 3
          %640 = vperm.xlu0 %639, %v637
          %v641 = vpop.permute.xlu0 %640
          %v643 = vmul.f32 %v626, %v641
          %645 = vset.pattern.permute.xlu0 4
          %646 = vperm.xlu0 %645, %v316
          %v647 = vpop.permute.xlu0 %646
          %v649 = vmul.f32 %v643, %v647
          %650 = vset.pattern.permute.xlu0 5
          %651 = vperm.xlu0 %650, %v316
          %v652 = vpop.permute.xlu0 %651
          %v654 = vadd.f32 %v649, %v652
          %v655 = vtanh.pop %v654
          %656 = vset.pattern.permute.xlu0 6
          %657 = vperm.xlu0 %656, %v316
          %v658 = vpop.permute.xlu0 %657
          %vm660 = vcmask 31744
          %v662 = vsel %vm660, %v309, 0
          %vm664 = vcmask 1043456
          %v666 = vsel %vm664, %v655, 0
          %668 = vmatpush.msra.mxu0 0.0
          %669 = vmatpush.msra.mxu0 0.0
          %670 = vmatpush.msra.mxu0 0.0
          %671 = vmatpush.msra.mxu0 0.0
          %672 = vmatpush.msra.mxu0 0.0
          %673 = vmatpush.msra.mxu0 0.0
          %674 = vmatpush.msra.mxu0 0.0
          %675 = vmatpush.msra.mxu0 0.0
          %676 = vmatpush.msra.mxu0 0.0
          %677 = vmatpush.msra.mxu0 0.0
          %678 = vmatpush.msra.mxu0 0.0
          %679 = vmatpush.msra.mxu0 0.0
          %680 = vmatpush.msra.mxu0 0.0
          %681 = vmatpush.msra.mxu0 0.0
          %682 = vmatpush.msra.mxu0 0.0
          %683 = vmatpush.msra.mxu0 %v666
          %684 = vmatmul.f32.gmra.mxu0 %v662
          %v685 = vpop.f32.mrf.mxu0
          %v686 = vadd.f32 %v658, %v685
          %687 = vdwg.mxu0
          %v688 = vsel %vm664, %v686, %v612
          %689 = vst [vmem:[%s611] sm:$0xff] %v688
          %v690 = vlaneseq
          %v691 = vand.u32 %v690, 127
          %s692 = smul.u32 %s24, 128
          %v693 = vstv %s692
          %v694 = vadd.s32 %v691, %v693
          %vm695 = vcmp.lt.s32.totalorder %v694, 257
          %v696 = vsel %vm695, 1, 0
          %v697 = vcvt.s32.f32 %v696
          %v698 = vmul.f32 %v686, %v697
          %v699 = vld [vmem:[#allocation3] sm:$0xf]
          %v700 = vsel %vm664, %v698, 0.0
          %701 = vadd.xlane.f32.xlu0 %v700
          %v702 = vpop.xlane.xlu0 %701
          %v703 = vadd.f32 %v699, %v702
          %vm704 = vcmask 35872
          %705 = vst.msk [vmem:[#allocation3] sm:$0xf] %vm704, %v703
          %v706 = vld [vmem:[#allocation3] sm:$0xf]
          %v707 = vmul.f32 %v698, %v686
          %v708 = vsel %vm664, %v707, 0.0
          %709 = vadd.xlane.f32.xlu0 %v708
          %v710 = vpop.xlane.xlu0 %709
          %v711 = vadd.f32 %v706, %v710
          %vm712 = vcmask 44072
          %713 = vst.msk [vmem:[#allocation3] sm:$0xf] %vm712, %v711
        $region64: #{tpu_custom_call.1} parent=47 // pred_fallthru
          _
        %p714 = scmp.eq.s32.totalorder %s23, 3
        // Predicated region
        $region65: #{tpu_custom_call.1} parent=47 // pred_check
          %p715 = pneg %p714
        $region66: #{tpu_custom_call.1} parent=47 // pred_check_branch
          %717 = sbr.rel (%p715) target = $region68
        $region67: #{tpu_custom_call.1} parent=47 // pred_region
          %s718 = smul.u32 %s24, 8
          %s719 = scalar_lea.vmem [#allocation2], %s718
          %v720 = vld [vmem:[%s719] sm:$0xff]
          %v721 = vld [vmem:[#allocation3] sm:$0xf]
          %v722 = vmul.f32 %v721, 0.0038910506
          %v723 = vmul.f32 %v722, %v722
          %725 = vrot.lane.b32.xlu0 %v723, 1
          %v726 = vpop.permute.xlu0 %725
          %v728 = vsub.f32 %v722, %v726
          %730 = vset.pattern.permute.xlu0 4
          %731 = vperm.xlu0 %730, %v722
          %v732 = vpop.permute.xlu0 %731
          %v734 = vsub.f32 %v720, %v732
          %v735 = vadd.f32 %v728, 1e-05
          %v736 = vrsqrt.pop %v735
          %v737 = vmul.f32 %v736, %v735
          %v738 = vmul.f32 %v737, %v736
          %v739 = vmul.f32 0.5, %v738
          %v740 = vsub.f32 1.5, %v739
          %v741 = vmul.f32 %v736, %v740
          %vm742 = vweird.f32 %v735
          %vm743 = vweird.f32 %v736
          %vm744 = vmor %vm742, %vm743
          %v745 = vsel %vm744, %v736, %v741
          %747 = vset.pattern.permute.xlu0 5
          %748 = vperm.xlu0 %747, %v745
          %v749 = vpop.permute.xlu0 %748
          %v751 = vmul.f32 %v734, %v749
          %753 = vset.pattern.permute.xlu0 7
          %754 = vperm.xlu0 %753, %v316
          %v755 = vpop.permute.xlu0 %754
          %v757 = vmul.f32 %v751, %v755
          %758 = vset.pattern.permute.xlu0 8
          %759 = vperm.xlu0 %758, %v316
          %v760 = vpop.permute.xlu0 %759
          %v762 = vadd.f32 %v757, %v760
          %v763 = vtanh.pop %v762
          %764 = vset.pattern.permute.xlu0 9
          %765 = vperm.xlu0 %764, %v316
          %v766 = vpop.permute.xlu0 %765
          %vm768 = vcmask 31744
          %v770 = vsel %vm768, %v310, 0
          %vm772 = vcmask 1043456
          %v774 = vsel %vm772, %v763, 0
          %776 = vmatpush.msra.mxu0 0.0
          %777 = vmatpush.msra.mxu0 0.0
          %778 = vmatpush.msra.mxu0 0.0
          %779 = vmatpush.msra.mxu0 0.0
          %780 = vmatpush.msra.mxu0 0.0
          %781 = vmatpush.msra.mxu0 0.0
          %782 = vmatpush.msra.mxu0 0.0
          %783 = vmatpush.msra.mxu0 0.0
          %784 = vmatpush.msra.mxu0 0.0
          %785 = vmatpush.msra.mxu0 0.0
          %786 = vmatpush.msra.mxu0 0.0
          %787 = vmatpush.msra.mxu0 0.0
          %788 = vmatpush.msra.mxu0 0.0
          %789 = vmatpush.msra.mxu0 0.0
          %790 = vmatpush.msra.mxu0 0.0
          %791 = vmatpush.msra.mxu0 %v774
          %792 = vmatmul.f32.gmra.mxu0 %v770
          %v793 = vpop.f32.mrf.mxu0
          %v794 = vadd.f32 %v766, %v793
          %795 = vdwg.mxu0
          %v796 = vperm.slane %v720, 4
          %v797 = vmul.f32 %v794, %v796
          %v798 = vld [vmem:[%s305] sm:$0xff]
          %v799 = vld [vmem:[%s305 + $0x8] sm:$0xff]
          %v800 = vld [vmem:[%s305 + $0x10] sm:$0xff]
          %v801 = vld [vmem:[%s305 + $0x18] sm:$0xff]
          %v802 = vld [vmem:[%s305 + $0x20] sm:$0xff]
          %v803 = vld [vmem:[%s305 + $0x28] sm:$0xff]
          %v804 = vld [vmem:[%s305 + $0x30] sm:$0xff]
          %v805 = vld [vmem:[%s305 + $0x38] sm:$0xff]
          %v806 = vld [vmem:[%s305 + $0x40] sm:$0xff]
          %v807 = vld [vmem:[%s305 + $0x48] sm:$0xff]
          %v808 = vld [vmem:[%s305 + $0x50] sm:$0xff]
          %v809 = vld [vmem:[%s305 + $0x58] sm:$0xff]
          %v810 = vld [vmem:[%s305 + $0x60] sm:$0xff]
          %v811 = vld [vmem:[%s305 + $0x68] sm:$0xff]
          %v812 = vld [vmem:[%s305 + $0x70] sm:$0xff]
          %v813 = vld [vmem:[%s305 + $0x78] sm:$0xff]
          %v814 = vlaneseq
          %v815 = vand.u32 %v814, 127
          %816 = vset.pattern.permute.xlu0 0
          %817 = vperm.xlu0 %816, %v798
          %v818 = vpop.permute.xlu0 %817
          %819 = vset.pattern.permute.xlu0 0
          %820 = vperm.xlu0 %819, %v799
          %v821 = vpop.permute.xlu0 %820
          %822 = vset.pattern.permute.xlu0 0
          %823 = vperm.xlu0 %822, %v800
          %v824 = vpop.permute.xlu0 %823
          %825 = vset.pattern.permute.xlu0 0
          %826 = vperm.xlu0 %825, %v801
          %v827 = vpop.permute.xlu0 %826
          %828 = vset.pattern.permute.xlu0 0
          %829 = vperm.xlu0 %828, %v802
          %v830 = vpop.permute.xlu0 %829
          %831 = vset.pattern.permute.xlu0 0
          %832 = vperm.xlu0 %831, %v803
          %v833 = vpop.permute.xlu0 %832
          %834 = vset.pattern.permute.xlu0 0
          %835 = vperm.xlu0 %834, %v804
          %v836 = vpop.permute.xlu0 %835
          %837 = vset.pattern.permute.xlu0 0
          %838 = vperm.xlu0 %837, %v805
          %v839 = vpop.permute.xlu0 %838
          %840 = vset.pattern.permute.xlu0 0
          %841 = vperm.xlu0 %840, %v806
          %v842 = vpop.permute.xlu0 %841
          %843 = vset.pattern.permute.xlu0 0
          %844 = vperm.xlu0 %843, %v807
          %v845 = vpop.permute.xlu0 %844
          %846 = vset.pattern.permute.xlu0 0
          %847 = vperm.xlu0 %846, %v808
          %v848 = vpop.permute.xlu0 %847
          %849 = vset.pattern.permute.xlu0 0
          %850 = vperm.xlu0 %849, %v809
          %v851 = vpop.permute.xlu0 %850
          %852 = vset.pattern.permute.xlu0 0
          %853 = vperm.xlu0 %852, %v810
          %v854 = vpop.permute.xlu0 %853
          %855 = vset.pattern.permute.xlu0 0
          %856 = vperm.xlu0 %855, %v811
          %v857 = vpop.permute.xlu0 %856
          %858 = vset.pattern.permute.xlu0 0
          %859 = vperm.xlu0 %858, %v812
          %v860 = vpop.permute.xlu0 %859
          %861 = vset.pattern.permute.xlu0 0
          %862 = vperm.xlu0 %861, %v813
          %v863 = vpop.permute.xlu0 %862
          %vm864 = vcmp.eq.s32.totalorder %v815, %v818
          %vm865 = vcmp.eq.s32.totalorder %v815, %v821
          %vm866 = vcmp.eq.s32.totalorder %v815, %v824
          %vm867 = vcmp.eq.s32.totalorder %v815, %v827
          %vm868 = vcmp.eq.s32.totalorder %v815, %v830
          %vm869 = vcmp.eq.s32.totalorder %v815, %v833
          %vm870 = vcmp.eq.s32.totalorder %v815, %v836
          %vm871 = vcmp.eq.s32.totalorder %v815, %v839
          %vm872 = vcmp.eq.s32.totalorder %v815, %v842
          %vm873 = vcmp.eq.s32.totalorder %v815, %v845
          %vm874 = vcmp.eq.s32.totalorder %v815, %v848
          %vm875 = vcmp.eq.s32.totalorder %v815, %v851
          %vm876 = vcmp.eq.s32.totalorder %v815, %v854
          %vm877 = vcmp.eq.s32.totalorder %v815, %v857
          %vm878 = vcmp.eq.s32.totalorder %v815, %v860
          %vm879 = vcmp.eq.s32.totalorder %v815, %v863
          %v880 = vsel %vm864, 1, 0
          %v881 = vsel %vm865, 1, 0
          %v882 = vsel %vm866, 1, 0
          %v883 = vsel %vm867, 1, 0
          %v884 = vsel %vm868, 1, 0
          %v885 = vsel %vm869, 1, 0
          %v886 = vsel %vm870, 1, 0
          %v887 = vsel %vm871, 1, 0
          %v888 = vsel %vm872, 1, 0
          %v889 = vsel %vm873, 1, 0
          %v890 = vsel %vm874, 1, 0
          %v891 = vsel %vm875, 1, 0
          %v892 = vsel %vm876, 1, 0
          %v893 = vsel %vm877, 1, 0
          %v894 = vsel %vm878, 1, 0
          %v895 = vsel %vm879, 1, 0
          %v896 = vcvt.s32.f32 %v880
          %v897 = vcvt.s32.f32 %v881
          %v898 = vcvt.s32.f32 %v882
          %v899 = vcvt.s32.f32 %v883
          %v900 = vcvt.s32.f32 %v884
          %v901 = vcvt.s32.f32 %v885
          %v902 = vcvt.s32.f32 %v886
          %v903 = vcvt.s32.f32 %v887
          %v904 = vcvt.s32.f32 %v888
          %v905 = vcvt.s32.f32 %v889
          %v906 = vcvt.s32.f32 %v890
          %v907 = vcvt.s32.f32 %v891
          %v908 = vcvt.s32.f32 %v892
          %v909 = vcvt.s32.f32 %v893
          %v910 = vcvt.s32.f32 %v894
          %v911 = vcvt.s32.f32 %v895
          %v912 = vld [vmem:[#allocation4] sm:$0xf]
          %913 = vmatpush.msra.mxu0 %v911
          %914 = vmatpush.msra.mxu0 %v910
          %915 = vmatpush.msra.mxu0 %v909
          %916 = vmatpush.msra.mxu0 %v908
          %917 = vmatpush.msra.mxu0 %v907
          %918 = vmatpush.msra.mxu0 %v906
          %919 = vmatpush.msra.mxu0 %v905
          %920 = vmatpush.msra.mxu0 %v904
          %921 = vmatpush.msra.mxu0 %v903
          %922 = vmatpush.msra.mxu0 %v902
          %923 = vmatpush.msra.mxu0 %v901
          %924 = vmatpush.msra.mxu0 %v900
          %925 = vmatpush.msra.mxu0 %v899
          %926 = vmatpush.msra.mxu0 %v898
          %927 = vmatpush.msra.mxu0 %v897
          %928 = vmatpush.msra.mxu0 %v896
          %929 = vmatmul.f32.gmra.mxu0 %v797
          %v930 = vpop.f32.mrf.mxu0
          %v931 = vadd.f32 0.0, %v930
          %932 = vdwg.mxu0
          %v933 = vadd.f32 %v912, %v931
          %vm934 = vcmask 519168
          %935 = vst.msk [vmem:[#allocation4] sm:$0xf] %vm934, %v933
        $region68: #{tpu_custom_call.1} parent=47 // pred_fallthru
          _
        %p936 = scmp.eq.s32.totalorder %s24, 2
        %p937 = pnand %p714, %p936
        %p938 = pneg %p937
        // Predicated region
        $region69: #{tpu_custom_call.1} parent=47 // pred_check
          _
        $region70: #{tpu_custom_call.1} parent=47 // pred_check_branch
          %940 = sbr.rel (%p937) target = $region72
        $region71: #{tpu_custom_call.1} parent=47 // pred_region
          %v941 = vld [vmem:[%s3] sm:$0xf]
          %v942 = vld [vmem:[#allocation4] sm:$0xf]
          %v943 = vlaneseq
          %v944 = vshrl.u32 %v943, 7
          %vm945 = vcmp.ge.s32.totalorder %v944, 2
          %v946 = vld [vmem:[%s4] sm:$0x1]
          %v948 = vperm.slane %v946, 0
          %v950 = vsel %vm945, %v948, 1.0
          %v951 = vmul.f32 %v942, %v950
          %953 = vrot.lane.b32.xlu0 %v311, 124
          %v954 = vpop.permute.xlu0 %953
          %vm955 = vcmask 31744
          %v956 = vsel %vm955, %v954, 0
          %vm958 = vcmask 1043456
          %v960 = vsel %vm958, %v951, 0
          %962 = vmatpush.msra.mxu0 0.0
          %963 = vmatpush.msra.mxu0 0.0
          %964 = vmatpush.msra.mxu0 0.0
          %965 = vmatpush.msra.mxu0 0.0
          %966 = vmatpush.msra.mxu0 0.0
          %967 = vmatpush.msra.mxu0 0.0
          %968 = vmatpush.msra.mxu0 0.0
          %969 = vmatpush.msra.mxu0 0.0
          %970 = vmatpush.msra.mxu0 0.0
          %971 = vmatpush.msra.mxu0 0.0
          %972 = vmatpush.msra.mxu0 0.0
          %973 = vmatpush.msra.mxu0 0.0
          %974 = vmatpush.msra.mxu0 0.0
          %975 = vmatpush.msra.mxu0 0.0
          %976 = vmatpush.msra.mxu0 0.0
          %977 = vmatpush.msra.mxu0 %v960
          %978 = vmatmul.f32.gmra.mxu0 %v956
          %v979 = vpop.f32.mrf.mxu0
          %v980 = vadd.f32 0.0, %v979
          %981 = vdwg.mxu0
          %v982 = vsel %vm955, %v311, 0
          %v985 = vsel %vm958, %v941, 0
          %987 = vmatpush.msra.mxu0 0.0
          %988 = vmatpush.msra.mxu0 0.0
          %989 = vmatpush.msra.mxu0 0.0
          %990 = vmatpush.msra.mxu0 0.0
          %991 = vmatpush.msra.mxu0 0.0
          %992 = vmatpush.msra.mxu0 0.0
          %993 = vmatpush.msra.mxu0 0.0
          %994 = vmatpush.msra.mxu0 0.0
          %995 = vmatpush.msra.mxu0 0.0
          %996 = vmatpush.msra.mxu0 0.0
          %997 = vmatpush.msra.mxu0 0.0
          %998 = vmatpush.msra.mxu0 0.0
          %999 = vmatpush.msra.mxu0 0.0
          %1000 = vmatpush.msra.mxu0 0.0
          %1001 = vmatpush.msra.mxu0 0.0
          %1002 = vmatpush.msra.mxu0 %v985
          %1003 = vmatmul.f32.gmra.mxu0 %v982
          %v1004 = vpop.f32.mrf.mxu0
          %v1005 = vadd.f32 %v980, %v1004
          %1006 = vdwg.mxu0
          %1008 = vset.pattern.permute.xlu0 10
          %1009 = vperm.xlu0 %1008, %v316
          %v1010 = vpop.permute.xlu0 %1009
          %v1012 = vadd.f32 %v1005, %v1010
          %vm1013 = vcmask 519168
          %v1014 = vsel %vm1013, %v1012, 0.0
          %1015 = vadd.xlane.f32.xlu0 %v1014
          %v1016 = vpop.xlane.xlu0 %1015
          %v1017 = vrcp.pop 64.0
          %v1018 = vmul.f32 64.0, %v1017
          %v1019 = vsub.f32 1.0, %v1018
          %v1020 = vmul.f32 %v1017, %v1019
          %v1021 = vadd.f32 %v1017, %v1020
          %vm1022 = vweird.f32 %v1017
          %v1023 = vsel %vm1022, %v1017, %v1021
          %v1024 = vmul.f32 %v1016, %v1023
          %v1025 = vmul.f32 %v1012, %v1012
          %v1026 = vsel %vm1013, %v1025, 0.0
          %1027 = vadd.xlane.f32.xlu0 %v1026
          %v1028 = vpop.xlane.xlu0 %1027
          %v1029 = vmul.f32 %v1028, %v1023
          %v1030 = vmul.f32 %v1024, %v1024
          %v1031 = vsub.f32 %v1029, %v1030
          %v1032 = vsub.f32 %v1012, %v1024
          %v1033 = vadd.f32 %v1031, 1e-05
          %v1034 = vrsqrt.pop %v1033
          %v1035 = vmul.f32 %v1034, %v1033
          %v1036 = vmul.f32 %v1035, %v1034
          %v1037 = vmul.f32 0.5, %v1036
          %v1038 = vsub.f32 1.5, %v1037
          %v1039 = vmul.f32 %v1034, %v1038
          %vm1040 = vweird.f32 %v1033
          %vm1041 = vweird.f32 %v1034
          %vm1042 = vmor %vm1040, %vm1041
          %v1043 = vsel %vm1042, %v1034, %v1039
          %v1044 = vmul.f32 %v1032, %v1043
          %1045 = vset.pattern.permute.xlu0 11
          %1046 = vperm.xlu0 %1045, %v316
          %v1047 = vpop.permute.xlu0 %1046
          %v1049 = vmul.f32 %v1044, %v1047
          %1050 = vset.pattern.permute.xlu0 12
          %1051 = vperm.xlu0 %1050, %v316
          %v1052 = vpop.permute.xlu0 %1051
          %v1054 = vadd.f32 %v1049, %v1052
          %v1055 = vtanh.pop %v1054
          %1056 = vset.pattern.permute.xlu0 13
          %1057 = vperm.xlu0 %1056, %v316
          %v1058 = vpop.permute.xlu0 %1057
          %v1061 = vsel %vm955, %v312, 0
          %v1064 = vsel %vm958, %v1055, 0
          %1066 = vmatpush.msra.mxu0 0.0
          %1067 = vmatpush.msra.mxu0 0.0
          %1068 = vmatpush.msra.mxu0 0.0
          %1069 = vmatpush.msra.mxu0 0.0
          %1070 = vmatpush.msra.mxu0 0.0
          %1071 = vmatpush.msra.mxu0 0.0
          %1072 = vmatpush.msra.mxu0 0.0
          %1073 = vmatpush.msra.mxu0 0.0
          %1074 = vmatpush.msra.mxu0 0.0
          %1075 = vmatpush.msra.mxu0 0.0
          %1076 = vmatpush.msra.mxu0 0.0
          %1077 = vmatpush.msra.mxu0 0.0
          %1078 = vmatpush.msra.mxu0 0.0
          %1079 = vmatpush.msra.mxu0 0.0
          %1080 = vmatpush.msra.mxu0 0.0
          %1081 = vmatpush.msra.mxu0 %v1064
          %1082 = vmatmul.f32.gmra.mxu0 %v1061
          %v1083 = vpop.f32.mrf.mxu0
          %v1084 = vadd.f32 %v1058, %v1083
          %1085 = vdwg.mxu0
          %v1086 = vsel %vm1013, %v1084, 0.0
          %1087 = vadd.xlane.f32.xlu0 %v1086
          %v1088 = vpop.xlane.xlu0 %1087
          %v1089 = vmul.f32 %v1088, %v1023
          %v1090 = vmul.f32 %v1084, %v1084
          %v1091 = vsel %vm1013, %v1090, 0.0
          %1092 = vadd.xlane.f32.xlu0 %v1091
          %v1093 = vpop.xlane.xlu0 %1092
          %v1094 = vmul.f32 %v1093, %v1023
          %v1095 = vmul.f32 %v1089, %v1089
          %v1096 = vsub.f32 %v1094, %v1095
          %v1097 = vsub.f32 %v1084, %v1089
          %v1098 = vadd.f32 %v1096, 1e-05
          %v1099 = vrsqrt.pop %v1098
          %v1100 = vmul.f32 %v1099, %v1098
          %v1101 = vmul.f32 %v1100, %v1099
          %v1102 = vmul.f32 0.5, %v1101
          %v1103 = vsub.f32 1.5, %v1102
          %v1104 = vmul.f32 %v1099, %v1103
          %vm1105 = vweird.f32 %v1098
          %vm1106 = vweird.f32 %v1099
          %vm1107 = vmor %vm1105, %vm1106
          %v1108 = vsel %vm1107, %v1099, %v1104
          %v1109 = vmul.f32 %v1097, %v1108
          %1110 = vset.pattern.permute.xlu0 14
          %1111 = vperm.xlu0 %1110, %v316
          %v1112 = vpop.permute.xlu0 %1111
          %v1114 = vmul.f32 %v1109, %v1112
          %1115 = vset.pattern.permute.xlu0 15
          %1116 = vperm.xlu0 %1115, %v316
          %v1117 = vpop.permute.xlu0 %1116
          %v1119 = vadd.f32 %v1114, %v1117
          %v1120 = vtanh.pop %v1119
          %1121 = vset.pattern.permute.xlu0 16
          %1122 = vperm.xlu0 %1121, %v316
          %v1123 = vpop.permute.xlu0 %1122
          %v1126 = vsel %vm955, %v313, 0
          %v1129 = vsel %vm958, %v1120, 0
          %1131 = vmatpush.msra.mxu0 0.0
          %1132 = vmatpush.msra.mxu0 0.0
          %1133 = vmatpush.msra.mxu0 0.0
          %1134 = vmatpush.msra.mxu0 0.0
          %1135 = vmatpush.msra.mxu0 0.0
          %1136 = vmatpush.msra.mxu0 0.0
          %1137 = vmatpush.msra.mxu0 0.0
          %1138 = vmatpush.msra.mxu0 0.0
          %1139 = vmatpush.msra.mxu0 0.0
          %1140 = vmatpush.msra.mxu0 0.0
          %1141 = vmatpush.msra.mxu0 0.0
          %1142 = vmatpush.msra.mxu0 0.0
          %1143 = vmatpush.msra.mxu0 0.0
          %1144 = vmatpush.msra.mxu0 0.0
          %1145 = vmatpush.msra.mxu0 0.0
          %1146 = vmatpush.msra.mxu0 %v1129
          %1147 = vmatmul.f32.gmra.mxu0 %v1126
          %v1148 = vpop.f32.mrf.mxu0
          %v1149 = vadd.f32 %v1123, %v1148
          %1150 = vdwg.mxu0
          %v1151 = vsel %vm1013, %v1149, 0.0
          %1152 = vadd.xlane.f32.xlu0 %v1151
          %v1153 = vpop.xlane.xlu0 %1152
          %v1154 = vmul.f32 %v1153, %v1023
          %v1155 = vmul.f32 %v1149, %v1149
          %v1156 = vsel %vm1013, %v1155, 0.0
          %1157 = vadd.xlane.f32.xlu0 %v1156
          %v1158 = vpop.xlane.xlu0 %1157
          %v1159 = vmul.f32 %v1158, %v1023
          %v1160 = vmul.f32 %v1154, %v1154
          %v1161 = vsub.f32 %v1159, %v1160
          %v1162 = vsub.f32 %v1149, %v1154
          %v1163 = vadd.f32 %v1161, 1e-05
          %v1164 = vrsqrt.pop %v1163
          %v1165 = vmul.f32 %v1164, %v1163
          %v1166 = vmul.f32 %v1165, %v1164
          %v1167 = vmul.f32 0.5, %v1166
          %v1168 = vsub.f32 1.5, %v1167
          %v1169 = vmul.f32 %v1164, %v1168
          %vm1170 = vweird.f32 %v1163
          %vm1171 = vweird.f32 %v1164
          %vm1172 = vmor %vm1170, %vm1171
          %v1173 = vsel %vm1172, %v1164, %v1169
          %v1174 = vmul.f32 %v1162, %v1173
          %1175 = vset.pattern.permute.xlu0 17
          %1176 = vperm.xlu0 %1175, %v316
          %v1177 = vpop.permute.xlu0 %1176
          %v1179 = vmul.f32 %v1174, %v1177
          %1180 = vset.pattern.permute.xlu0 18
          %1181 = vperm.xlu0 %1180, %v316
          %v1182 = vpop.permute.xlu0 %1181
          %v1184 = vadd.f32 %v1179, %v1182
          %v1185 = vtanh.pop %v1184
          %1186 = vset.pattern.permute.xlu0 19
          %1187 = vperm.xlu0 %1186, %v316
          %v1188 = vpop.permute.xlu0 %1187
          %v1191 = vsel %vm955, %v314, 0
          %v1194 = vsel %vm958, %v1185, 0
          %1196 = vmatpush.msra.mxu0 0.0
          %1197 = vmatpush.msra.mxu0 0.0
          %1198 = vmatpush.msra.mxu0 0.0
          %1199 = vmatpush.msra.mxu0 0.0
          %1200 = vmatpush.msra.mxu0 0.0
          %1201 = vmatpush.msra.mxu0 0.0
          %1202 = vmatpush.msra.mxu0 0.0
          %1203 = vmatpush.msra.mxu0 0.0
          %1204 = vmatpush.msra.mxu0 0.0
          %1205 = vmatpush.msra.mxu0 0.0
          %1206 = vmatpush.msra.mxu0 0.0
          %1207 = vmatpush.msra.mxu0 0.0
          %1208 = vmatpush.msra.mxu0 0.0
          %1209 = vmatpush.msra.mxu0 0.0
          %1210 = vmatpush.msra.mxu0 0.0
          %1211 = vmatpush.msra.mxu0 %v1194
          %1212 = vmatmul.f32.gmra.mxu0 %v1191
          %v1213 = vpop.f32.mrf.mxu0
          %v1214 = vadd.f32 %v1188, %v1213
          %1215 = vdwg.mxu0
          %v1216 = vsel %vm1013, %v1214, 0.0
          %1217 = vadd.xlane.f32.xlu0 %v1216
          %v1218 = vpop.xlane.xlu0 %1217
          %v1219 = vmul.f32 %v1218, %v1023
          %v1220 = vmul.f32 %v1214, %v1214
          %v1221 = vsel %vm1013, %v1220, 0.0
          %1222 = vadd.xlane.f32.xlu0 %v1221
          %v1223 = vpop.xlane.xlu0 %1222
          %v1224 = vmul.f32 %v1223, %v1023
          %v1225 = vmul.f32 %v1219, %v1219
          %v1226 = vsub.f32 %v1224, %v1225
          %v1227 = vsub.f32 %v1214, %v1219
          %v1228 = vadd.f32 %v1226, 1e-05
          %v1229 = vrsqrt.pop %v1228
          %v1230 = vmul.f32 %v1229, %v1228
          %v1231 = vmul.f32 %v1230, %v1229
          %v1232 = vmul.f32 0.5, %v1231
          %v1233 = vsub.f32 1.5, %v1232
          %v1234 = vmul.f32 %v1229, %v1233
          %vm1235 = vweird.f32 %v1228
          %vm1236 = vweird.f32 %v1229
          %vm1237 = vmor %vm1235, %vm1236
          %v1238 = vsel %vm1237, %v1229, %v1234
          %v1239 = vmul.f32 %v1227, %v1238
          %1240 = vset.pattern.permute.xlu0 20
          %1241 = vperm.xlu0 %1240, %v316
          %v1242 = vpop.permute.xlu0 %1241
          %v1244 = vmul.f32 %v1239, %v1242
          %1245 = vset.pattern.permute.xlu0 21
          %1246 = vperm.xlu0 %1245, %v316
          %v1247 = vpop.permute.xlu0 %1246
          %v1249 = vadd.f32 %v1244, %v1247
          %v1250 = vtanh.pop %v1249
          %1251 = vset.pattern.permute.xlu0 22
          %1252 = vperm.xlu0 %1251, %v316
          %v1253 = vpop.permute.xlu0 %1252
          %v1256 = vsel %vm955, %v315, 0
          %v1259 = vsel %vm958, %v1250, 0
          %1261 = vmatpush.msra.mxu0 0.0
          %1262 = vmatpush.msra.mxu0 0.0
          %1263 = vmatpush.msra.mxu0 0.0
          %1264 = vmatpush.msra.mxu0 0.0
          %1265 = vmatpush.msra.mxu0 0.0
          %1266 = vmatpush.msra.mxu0 0.0
          %1267 = vmatpush.msra.mxu0 0.0
          %1268 = vmatpush.msra.mxu0 0.0
          %1269 = vmatpush.msra.mxu0 0.0
          %1270 = vmatpush.msra.mxu0 0.0
          %1271 = vmatpush.msra.mxu0 0.0
          %1272 = vmatpush.msra.mxu0 0.0
          %1273 = vmatpush.msra.mxu0 0.0
          %1274 = vmatpush.msra.mxu0 0.0
          %1275 = vmatpush.msra.mxu0 0.0
          %1276 = vmatpush.msra.mxu0 %v1259
          %1277 = vmatmul.f32.gmra.mxu0 %v1256
          %v1278 = vpop.f32.mrf.mxu0
          %v1279 = vadd.f32 %v1253, %v1278
          %1280 = vdwg.mxu0
          %vm1281 = vcmask 517120
          %1282 = vst.msk [vmem:[#allocation5] sm:$0x3] %vm1281, %v1279
        $region72: #{tpu_custom_call.1} parent=47 // pred_fallthru
          _
        // Predicated region
        $region73: #{tpu_custom_call.1} parent=47 // pred_check
          %p1283 = pneg %p206
        $region74: #{tpu_custom_call.1} parent=47 // pred_check_branch
          %1285 = sbr.rel (%p1283) target = $region76
        $region75: #{tpu_custom_call.1} parent=47 // pred_region
          %1287 = vsyncadd [#allocation6], 0
          %s1289 = sshll.u32 [#allocation5], 4
          %s1290 = int_to_ptr.vmem [resolvable:$true] %s1289
          %s1291 = sshll.u32 %s7, 4
          %s1292 = int_to_ptr.hbm [resolvable:$true] %s1291
          %1294 = dma.vmem_to_hbm [thread:$0]  %s1290, 32, %s1292, [#allocation6]
        $region76: #{tpu_custom_call.1} parent=47 // pred_fallthru
          _
        // Predicated region
        $region77: #{tpu_custom_call.1} parent=47 // pred_check
          %p1295 = pneg %p206
        $region78: #{tpu_custom_call.1} parent=47 // pred_check_branch
          %1297 = sbr.rel (%p1295) target = $region80
        $region79: #{tpu_custom_call.1} parent=47 // pred_region
          %1299 = dma.done [#allocation6], 32
        $region80: #{tpu_custom_call.1} parent=47 // pred_fallthru
          _
      $region48: #{tpu_custom_call.1} parent=5 // pred_fallthru
        _
      %p1300 = scmp.le.s32.totalorder 2, %s14
      // Predicated region
      $region81: #{tpu_custom_call.1} parent=5 // pred_check
        %p1301 = pneg %p1300
      $region82: #{tpu_custom_call.1} parent=5 // pred_check_branch
        %1303 = sbr.rel (%p1301) target = $region84
      $region83: #{tpu_custom_call.1} parent=5 // pred_region
        %s1304 = ssub.s32 %s14, 2
      $region84: #{tpu_custom_call.1} parent=5 // pred_fallthru
        _
    $region6: #{tpu_custom_call.1} parent=1 // loop_footer
      %s18 = sadd.s32 1, %s14
    $region7: #{tpu_custom_call.1} parent=1 // loop_footer_branch
      %13 = sbr.rel target = $region3
    $region8: #{tpu_custom_call.1} parent=1 // loop_exit
      _
    %1305 = vsyncpa [#allocation6], 1
    %s1306 = scalar_lea.sflag [#allocation6], 1
    %1307 = vsyncpa %s1306, 1

</llo_original>
